<compile_context>
chip_gen: v5e
topology: v5e:2x2
jax: 0.10.0
libtpu: 0.0.40
codegen_flags: <defaults>
</compile_context>

<pallas_src>
import functools
import math

import jax
import jax.numpy as jnp
from jax import lax
from jax.experimental import pallas as pl
from jax.experimental.pallas import tpu as pltpu


# ---------------------------------------------------------------------------
# Helpers
# ---------------------------------------------------------------------------
def _pick_block(seq_len, prefs):
    """Largest preferred tile that divides seq_len, else the full extent."""
    for b in prefs:
        if b <= seq_len and seq_len % b == 0:
            return b
    return seq_len


def _head_group_size(heads_num, head_dim):
    """Smallest divisor g of heads_num with (g*head_dim) % 128 == 0 (lane-dense
    tiles); falls back to all heads (full hidden dim is always a legal block)."""
    if head_dim % 128 == 0:
        return 1
    for g in range(1, heads_num + 1):
        if heads_num % g == 0 and (g * head_dim) % 128 == 0:
            return g
    return heads_num


# ---------------------------------------------------------------------------
# Kernel 1: fused per-head-group QKV projection.
#   grid = (B, S // block_r, heads_num // G)
#   proj[t, b, r_tile, hg*GD:(hg+1)*GD] = x_t[b, r_tile, :] @ W_t[:, hg_cols] + b_t
# (W/b for Q already carry the 1/sqrt(D) attention scale, folded in the wrapper.)
# ---------------------------------------------------------------------------
def _qkv_proj_kernel(xq_ref, xk_ref, xv_ref, w_ref, b_ref, o_ref, *, use_bf16):
    # x*: [1, br, H]; w: [3, H, GD]; b: [3, 1, GD]; o: [3, 1, br, GD]
    def project(x_ref, i):
        x = x_ref[0]
        if use_bf16:
            x = x.astype(jnp.bfloat16)          # weights already bf16 (wrapper)
        y = lax.dot_general(x, w_ref[i], (((1,), (0,)), ((), ())),
                            preferred_element_type=jnp.float32)
        o_ref[i, 0] = (y + b_ref[i]).astype(o_ref.dtype)

    project(xq_ref, 0)
    project(xk_ref, 1)
    project(xv_ref, 2)


# ---------------------------------------------------------------------------
# Kernel 2: flash-style attention (G heads per step) + fused output projection.
#   grid = (B, S // block_q, heads_num // G, S // block_kv)
#   scratch: per-head running max / denom / PV accumulators + [bq, H] out slab
# ---------------------------------------------------------------------------
def _flash_mha_kernel(mask_ref, q_ref, k_ref, v_ref, wo_ref, bo_ref, o_ref,
                      m_scr, l_scr, acc_scr, o_acc,
                      *, heads_per_group, head_dim, use_bf16, approx_recip):
    G, D = heads_per_group, head_dim
    GD = G * D
    hg = pl.program_id(2)
    ki = pl.program_id(3)
    n_hg = pl.num_programs(2)
    n_kv = pl.num_programs(3)

    @pl.when(jnp.logical_and(hg == 0, ki == 0))
    def _():
        o_acc[...] = jnp.zeros(o_acc.shape, o_acc.dtype)

    @pl.when(ki == 0)
    def _():
        m_scr[...] = jnp.full(m_scr.shape, -jnp.inf, m_scr.dtype)
        l_scr[...] = jnp.zeros(l_scr.shape, l_scr.dtype)
        acc_scr[...] = jnp.zeros(acc_scr.shape, acc_scr.dtype)

    q = q_ref[0, 0]                                   # [bq,  GD] (scale folded in)
    k = k_ref[0, 0]                                   # [bkv, GD]
    v = v_ref[0, 0]                                   # [bkv, GD]
    neg = (1.0 - mask_ref[0]) * -10000.0              # [1, bkv] additive key mask

    # ---- online softmax: one unrolled pass per head of the group -----------
    for g in range(G):
        lo = g * D
        q_g = q[:, lo:lo + D]
        k_g = k[:, lo:lo + D]
        v_g = v[:, lo:lo + D]

        s = lax.dot_general(q_g, k_g, (((1,), (1,)), ((), ())),
                            preferred_element_type=jnp.float32)   # [bq, bkv]
        s = s + neg

        m_prev = m_scr[g]                                          # [bq, 1]
        m_new = jnp.maximum(m_prev, jnp.max(s, axis=-1, keepdims=True))
        alpha = jnp.exp(m_prev - m_new)
        if use_bf16:
            # exp in bf16 on the EUP (v6e/v7x fast path); m/l statistics stay f32.
            p = jnp.exp((s - m_new).astype(jnp.bfloat16))
            p_sum = jnp.sum(p.astype(jnp.float32), axis=-1, keepdims=True)
        else:
            p = jnp.exp(s - m_new)
            p_sum = jnp.sum(p, axis=-1, keepdims=True)
        l_scr[g] = alpha * l_scr[g] + p_sum
        acc_scr[g] = alpha * acc_scr[g] + lax.dot_general(
            p.astype(v_g.dtype), v_g, (((1,), (0,)), ((), ())),
            preferred_element_type=jnp.float32)
        m_scr[g] = m_new
    # TODO(synk): nn.Dropout on the attention probs is identity in eval mode.

    # ---- end of KV loop: normalize + fused final-linear contribution -------
    # out += sum_g ctx_g @ Wo[(hg*G+g)*D : +D, :]   (Wo is resident in VMEM)
    @pl.when(ki == n_kv - 1)
    def _():
        start = pl.multiple_of(hg * GD, GD)
        wo_grp = wo_ref[pl.ds(start, GD), :]                       # [GD, H]
        contrib = None
        for g in range(G):
            inv_l = pl.reciprocal(l_scr[g], approx=approx_recip)   # [bq, 1]
            ctx = acc_scr[g] * inv_l                               # [bq, D] f32
            if use_bf16:
                ctx = ctx.astype(jnp.bfloat16)
            part = lax.dot_general(ctx, wo_grp[g * D:(g + 1) * D, :],
                                   (((1,), (0,)), ((), ())),
                                   preferred_element_type=jnp.float32)
            contrib = part if contrib is None else contrib + part
        o_acc[...] += contrib

    @pl.when(jnp.logical_and(hg == n_hg - 1, ki == n_kv - 1))
    def _():
        o_ref[0] = (o_acc[...] + bo_ref[...]).astype(o_ref.dtype)


# ---------------------------------------------------------------------------
# Wrapper
# ---------------------------------------------------------------------------
def multi_headed_attention(key, value, query, mask, params, heads_num, *,
                           use_bf16=True, approx_recip=None,
                           block_q=None, block_kv=None, block_r=None):
    """key/value/query: [B, S, H] float32, mask: [B, S] (0 == masked)."""
    B, S, H = key.shape
    assert H % heads_num == 0
    D = H // heads_num
    assert D % 8 == 0, "per-head size must be a multiple of 8"
    if approx_recip is None:
        approx_recip = use_bf16

    G = _head_group_size(heads_num, D)          # heads per lane-dense group
    GD = G * D
    n_hg = heads_num // G

    bq = block_q or _pick_block(S, (256, 128, 64, 32, 16, 8))
    bkv = block_kv or _pick_block(S, (512, 256, 128, 64, 32, 16, 8))
    br = block_r or _pick_block(S, (512, 256, 128, 64, 32, 16, 8))
    assert S % bq == 0 and S % bkv == 0 and S % br == 0

    f32 = jnp.float32
    wdt = jnp.bfloat16 if use_bf16 else f32
    qkv_dtype = jnp.bfloat16 if use_bf16 else f32
    scale = 1.0 / math.sqrt(float(D))

    # PyTorch nn.Linear stores W as [out, in]; pre-transpose so kernels do x@W+b.
    # Fold the 1/sqrt(D) score scale into the Q projection (pure wrapper math).
    w_q = params["wq"].T.astype(f32) * scale
    w_k = params["wk"].T.astype(f32)
    w_v = params["wv"].T.astype(f32)
    W3 = jnp.stack([w_q, w_k, w_v]).astype(wdt)                  # [3, H, H] (in,out)
    b3 = jnp.stack([params["bq"].astype(f32) * scale,
                    params["bk"].astype(f32),
                    params["bv"].astype(f32)]).reshape(3, 1, H)  # [3, 1, H] f32
    wo_t = params["wo"].T.astype(wdt)                            # [H, H]
    bo = params["bo"].astype(f32).reshape(1, H)
    mask3 = mask.astype(f32).reshape(B, 1, S)

    q_in = query.astype(f32)
    k_in = key.astype(f32)
    v_in = value.astype(f32)

    # ---- kernel 1: per-head-group QKV projection -> [3, B, S, H] ------------
    n_r = S // br
    proj = pl.pallas_call(
        functools.partial(_qkv_proj_kernel, use_bf16=use_bf16),
        out_shape=jax.ShapeDtypeStruct((3, B, S, H), qkv_dtype),
        grid_spec=pltpu.PrefetchScalarGridSpec(
            num_scalar_prefetch=0,
            grid=(B, n_r, n_hg),          # head-groups innermost -> x tiles resident
            in_specs=[
                pl.BlockSpec((1, br, H), lambda b, r, hg: (b, r, 0)),   # query
                pl.BlockSpec((1, br, H), lambda b, r, hg: (b, r, 0)),   # key
                pl.BlockSpec((1, br, H), lambda b, r, hg: (b, r, 0)),   # value
                pl.BlockSpec((3, H, GD), lambda b, r, hg: (0, 0, hg)),  # W group cols
                pl.BlockSpec((3, 1, GD), lambda b, r, hg: (0, 0, hg)),  # b group cols
            ],
            out_specs=pl.BlockSpec((3, 1, br, GD), lambda b, r, hg: (0, b, r, hg)),
        ),
        compiler_params=pltpu.CompilerParams(
            dimension_semantics=("parallel", "parallel", "arbitrary"),
            vmem_limit_bytes=32 * 1024 * 1024),
    )(q_in, k_in, v_in, W3, b3)

    # ---- kernel 2: flash attention + fused final linear ---------------------
    n_q = S // bq
    n_kv = S // bkv
    out = pl.pallas_call(
        functools.partial(_flash_mha_kernel,
                          heads_per_group=G, head_dim=D,
                          use_bf16=use_bf16, approx_recip=approx_recip),
        out_shape=jax.ShapeDtypeStruct((B, S, H), query.dtype),
        grid_spec=pltpu.PrefetchScalarGridSpec(
            num_scalar_prefetch=0,
            grid=(B, n_q, n_hg, n_kv),
            in_specs=[
                # additive key mask [B, 1, S]
                pl.BlockSpec((1, 1, bkv), lambda b, qi, hg, ki: (b, 0, ki)),
                # Q / K / V lane-dense head-group tiles from proj [3, B, S, H]
                pl.BlockSpec((1, 1, bq, GD), lambda b, qi, hg, ki: (0, b, qi, hg)),
                pl.BlockSpec((1, 1, bkv, GD), lambda b, qi, hg, ki: (1, b, ki, hg)),
                pl.BlockSpec((1, 1, bkv, GD), lambda b, qi, hg, ki: (2, b, ki, hg)),
                # final-linear weight: fully resident (constant index map) + bias
                pl.BlockSpec((H, H), lambda b, qi, hg, ki: (0, 0)),
                pl.BlockSpec((1, H), lambda b, qi, hg, ki: (0, 0)),
            ],
            out_specs=pl.BlockSpec((1, bq, H), lambda b, qi, hg, ki: (b, qi, 0)),
            scratch_shapes=[
                pltpu.VMEM((G, bq, 1), jnp.float32),   # per-head running max
                pltpu.VMEM((G, bq, 1), jnp.float32),   # per-head running denom
                pltpu.VMEM((G, bq, D), jnp.float32),   # per-head PV accumulators
                pltpu.VMEM((bq, H), jnp.float32),      # output-projection accumulator
            ],
        ),
        compiler_params=pltpu.CompilerParams(
            dimension_semantics=("parallel", "parallel", "arbitrary", "arbitrary"),
            vmem_limit_bytes=32 * 1024 * 1024),
    )(mask3, proj, proj, proj, wo_t, bo)
    return out


# ---------------------------------------------------------------------------
# Pure-JAX reference mirroring the PyTorch forward (eval mode).
# ---------------------------------------------------------------------------
def _reference(key, value, query, mask, params, heads_num):
    B, S, H = key.shape
    D = H // heads_num

    def linear(x, w, b):
        return x @ w.T + b

    q = linear(query, params["wq"], params["bq"])
    k = linear(key, params["wk"], params["bk"])
    v = linear(value, params["wv"], params["bv"])

    def shape(x):
        return x.reshape(B, S, heads_num, D).transpose(0, 2, 1, 3)

    q, k, v = shape(q), shape(k), shape(v)
    scores = jnp.einsum("bhqd,bhkd->bhqk", q, k) / math.sqrt(float(D))
    mask_b = mask.astype(jnp.float32)[:, None, None, :]           # [B,1,1,S]
    scores = scores + (1.0 - mask_b) * -10000.0
    probs = jax.nn.softmax(scores, axis=-1)
    ctx = jnp.einsum("bhqk,bhkd->bhqd", probs, v)
    ctx = ctx.transpose(0, 2, 1, 3).reshape(B, S, H)
    return linear(ctx, params["wo"], params["bo"])


if __name__ == "__main__":
    rng = jax.random.PRNGKey(0)

    def make_case(kcase, B, S, H):
        keys = jax.random.split(kcase, 11)

        def init_linear(kw, kb):
            bound = 1.0 / math.sqrt(H)
            w = jax.random.uniform(kw, (H, H), jnp.float32, -bound, bound)
            b = jax.random.uniform(kb, (H,), jnp.float32, -bound, bound)
            return w, b

        wq, bq = init_linear(keys[0], keys[1])
        wk, bk = init_linear(keys[2], keys[3])
        wv, bv = init_linear(keys[4], keys[5])
        wo, bo = init_linear(keys[6], keys[7])
        params = dict(wq=wq, bq=bq, wk=wk, bk=bk, wv=wv, bv=bv, wo=wo, bo=bo)
        key_in = jax.random.normal(keys[8], (B, S, H), jnp.float32)
        value_in = jax.random.normal(keys[9], (B, S, H), jnp.float32)
        query_in = jax.random.normal(keys[10], (B, S, H), jnp.float32)
        # mask: 0 == masked position; mask out the tail of each sequence.
        mask = jnp.concatenate(
            [jnp.ones((B, S - 5), jnp.float32), jnp.zeros((B, 5), jnp.float32)],
            axis=1)
        return params, key_in, value_in, query_in, mask

    k1, k2 = jax.random.split(rng)

    # ---- Case A: D=32 -> all 4 heads form one 128-lane group ---------------
    B, S, H, heads = 2, 256, 128, 4
    params, key_in, value_in, query_in, mask = make_case(k1, B, S, H)
    ref = _reference(key_in, value_in, query_in, mask, params, heads)

    # Fast path: bf16 MXU operands + bf16 EUP exp, f32 stats, approx reciprocal.
    out_fast = multi_headed_attention(key_in, value_in, query_in, mask, params, heads)
    out_fast = jax.block_until_ready(out_fast)
    assert out_fast.shape == (B, S, H)
    assert jnp.allclose(out_fast, ref, atol=5e-2, rtol=5e-2), "bf16 kernel mismatch"

    # Exact path (f32 matmuls/exp, exact reciprocal) with multiple q/kv/row tiles:
    # exercises the online-softmax accumulation across kv tiles.
    out_f32 = multi_headed_attention(key_in, value_in, query_in, mask, params, heads,
                                     use_bf16=False, approx_recip=False,
                                     block_q=128, block_kv=128, block_r=128)
    out_f32 = jax.block_until_ready(out_f32)
    assert jnp.allclose(out_f32, ref, atol=2e-4, rtol=2e-4), "f32 kernel mismatch"

    # ---- Case B: D=64 -> two head groups (exercises head-group reduction) ---
    B, S, H, heads = 2, 128, 256, 4
    params, key_in, value_in, query_in, mask = make_case(k2, B, S, H)
    ref = _reference(key_in, value_in, query_in, mask, params, heads)
    out_b = multi_headed_attention(key_in, value_in, query_in, mask, params, heads,
                                   use_bf16=False, approx_recip=False)
    out_b = jax.block_until_ready(out_b)
    assert jnp.allclose(out_b, ref, atol=2e-4, rtol=2e-4), "multi-group mismatch"

    print("KERNEL_OK")
</pallas_src>

<mosaic_0001>
module attributes {stable_mosaic.version = 11 : i64} {
  func.func @_qkv_proj_kernel(%arg0: i32, %arg1: i32, %arg2: i32, %arg3: memref<1x256x128xf32, #tpu.memory_space<vmem>>, %arg4: memref<1x256x128xf32, #tpu.memory_space<vmem>>, %arg5: memref<1x256x128xf32, #tpu.memory_space<vmem>>, %arg6: memref<3x128x128xbf16, #tpu.memory_space<vmem>>, %arg7: memref<3x1x128xf32, #tpu.memory_space<vmem>>, %arg8: memref<3x1x256x128xbf16, #tpu.memory_space<vmem>>) attributes {dimension_semantics = [#tpu.dimension_semantics<parallel>, #tpu.dimension_semantics<parallel>, #tpu.dimension_semantics<arbitrary>], iteration_bounds = array<i64: 2, 1, 1>, scalar_prefetch = 0 : i64, scratch_operands = 0 : i64, tpu.core_type = #tpu.core_type<tc>, window_params = [{transform_indices = @transform_0, window_bounds = array<i64: 1, 256, 128>}, {transform_indices = @transform_1, window_bounds = array<i64: 1, 256, 128>}, {transform_indices = @transform_2, window_bounds = array<i64: 1, 256, 128>}, {transform_indices = @transform_3, window_bounds = array<i64: 3, 128, 128>}, {transform_indices = @transform_4, window_bounds = array<i64: 3, 1, 128>}, {transform_indices = @transform_5, window_bounds = array<i64: 3, 1, 256, 128>}]} {
    %c0 = arith.constant 0 : index
    %c0_0 = arith.constant 0 : index
    %c0_1 = arith.constant 0 : index
    %0 = vector.load %arg3[%c0, %c0_0, %c0_1] : memref<1x256x128xf32, #tpu.memory_space<vmem>>, vector<1x256x128xf32>
    %1 = vector.shape_cast %0 : vector<1x256x128xf32> to vector<256x128xf32>
    %2 = arith.truncf %1 : vector<256x128xf32> to vector<256x128xbf16>
    %c0_2 = arith.constant 0 : index
    %c0_3 = arith.constant 0 : index
    %c0_4 = arith.constant 0 : index
    %3 = vector.load %arg6[%c0_2, %c0_3, %c0_4] : memref<3x128x128xbf16, #tpu.memory_space<vmem>>, vector<1x128x128xbf16>
    %4 = vector.shape_cast %3 : vector<1x128x128xbf16> to vector<128x128xbf16>
    %cst = arith.constant dense<0.000000e+00> : vector<256x128xf32>
    %5 = tpu.matmul %2, %4, %cst {dimension_numbers = #tpu.dot_dimension_numbers<[1], [0], [0], [1], [0, 0, 1, 1], [], []>} : vector<256x128xbf16>, vector<128x128xbf16>, vector<256x128xf32> -> vector<256x128xf32>
    %c0_5 = arith.constant 0 : index
    %c0_6 = arith.constant 0 : index
    %c0_7 = arith.constant 0 : index
    %6 = vector.load %arg7[%c0_5, %c0_6, %c0_7] : memref<3x1x128xf32, #tpu.memory_space<vmem>>, vector<1x1x128xf32>
    %7 = vector.shape_cast %6 : vector<1x1x128xf32> to vector<1x128xf32>
    %8 = vector.broadcast %7 : vector<1x128xf32> to vector<256x128xf32>
    %9 = arith.addf %5, %8 : vector<256x128xf32>
    %10 = arith.truncf %9 : vector<256x128xf32> to vector<256x128xbf16>
    %c0_8 = arith.constant 0 : index
    %c0_9 = arith.constant 0 : index
    %c0_10 = arith.constant 0 : index
    %c0_11 = arith.constant 0 : index
    %11 = vector.load %arg8[%c0_8, %c0_9, %c0_10, %c0_11] : memref<3x1x256x128xbf16, #tpu.memory_space<vmem>>, vector<1x1x256x128xbf16>
    %12 = vector.shape_cast %11 : vector<1x1x256x128xbf16> to vector<256x128xbf16>
    %13 = vector.shape_cast %10 : vector<256x128xbf16> to vector<1x1x256x128xbf16>
    tpu.vector_store %arg8[%c0_8, %c0_9, %c0_10, %c0_11], %13 {strides = array<i32>} : memref<3x1x256x128xbf16, #tpu.memory_space<vmem>>, vector<1x1x256x128xbf16>,
    %c0_12 = arith.constant 0 : index
    %c0_13 = arith.constant 0 : index
    %c0_14 = arith.constant 0 : index
    %14 = vector.load %arg4[%c0_12, %c0_13, %c0_14] : memref<1x256x128xf32, #tpu.memory_space<vmem>>, vector<1x256x128xf32>
    %15 = vector.shape_cast %14 : vector<1x256x128xf32> to vector<256x128xf32>
    %16 = arith.truncf %15 : vector<256x128xf32> to vector<256x128xbf16>
    %c1 = arith.constant 1 : index
    %c0_15 = arith.constant 0 : index
    %c0_16 = arith.constant 0 : index
    %17 = vector.load %arg6[%c1, %c0_15, %c0_16] : memref<3x128x128xbf16, #tpu.memory_space<vmem>>, vector<1x128x128xbf16>
    %18 = vector.shape_cast %17 : vector<1x128x128xbf16> to vector<128x128xbf16>
    %cst_17 = arith.constant dense<0.000000e+00> : vector<256x128xf32>
    %19 = tpu.matmul %16, %18, %cst_17 {dimension_numbers = #tpu.dot_dimension_numbers<[1], [0], [0], [1], [0, 0, 1, 1], [], []>} : vector<256x128xbf16>, vector<128x128xbf16>, vector<256x128xf32> -> vector<256x128xf32>
    %c1_18 = arith.constant 1 : index
    %c0_19 = arith.constant 0 : index
    %c0_20 = arith.constant 0 : index
    %20 = vector.load %arg7[%c1_18, %c0_19, %c0_20] : memref<3x1x128xf32, #tpu.memory_space<vmem>>, vector<1x1x128xf32>
    %21 = vector.shape_cast %20 : vector<1x1x128xf32> to vector<1x128xf32>
    %22 = vector.broadcast %21 : vector<1x128xf32> to vector<256x128xf32>
    %23 = arith.addf %19, %22 : vector<256x128xf32>
    %24 = arith.truncf %23 : vector<256x128xf32> to vector<256x128xbf16>
    %c1_21 = arith.constant 1 : index
    %c0_22 = arith.constant 0 : index
    %c0_23 = arith.constant 0 : index
    %c0_24 = arith.constant 0 : index
    %25 = vector.load %arg8[%c1_21, %c0_22, %c0_23, %c0_24] : memref<3x1x256x128xbf16, #tpu.memory_space<vmem>>, vector<1x1x256x128xbf16>
    %26 = vector.shape_cast %25 : vector<1x1x256x128xbf16> to vector<256x128xbf16>
    %27 = vector.shape_cast %24 : vector<256x128xbf16> to vector<1x1x256x128xbf16>
    tpu.vector_store %arg8[%c1_21, %c0_22, %c0_23, %c0_24], %27 {strides = array<i32>} : memref<3x1x256x128xbf16, #tpu.memory_space<vmem>>, vector<1x1x256x128xbf16>,
    %c0_25 = arith.constant 0 : index
    %c0_26 = arith.constant 0 : index
    %c0_27 = arith.constant 0 : index
    %28 = vector.load %arg5[%c0_25, %c0_26, %c0_27] : memref<1x256x128xf32, #tpu.memory_space<vmem>>, vector<1x256x128xf32>
    %29 = vector.shape_cast %28 : vector<1x256x128xf32> to vector<256x128xf32>
    %30 = arith.truncf %29 : vector<256x128xf32> to vector<256x128xbf16>
    %c2 = arith.constant 2 : index
    %c0_28 = arith.constant 0 : index
    %c0_29 = arith.constant 0 : index
    %31 = vector.load %arg6[%c2, %c0_28, %c0_29] : memref<3x128x128xbf16, #tpu.memory_space<vmem>>, vector<1x128x128xbf16>
    %32 = vector.shape_cast %31 : vector<1x128x128xbf16> to vector<128x128xbf16>
    %cst_30 = arith.constant dense<0.000000e+00> : vector<256x128xf32>
    %33 = tpu.matmul %30, %32, %cst_30 {dimension_numbers = #tpu.dot_dimension_numbers<[1], [0], [0], [1], [0, 0, 1, 1], [], []>} : vector<256x128xbf16>, vector<128x128xbf16>, vector<256x128xf32> -> vector<256x128xf32>
    %c2_31 = arith.constant 2 : index
    %c0_32 = arith.constant 0 : index
    %c0_33 = arith.constant 0 : index
    %34 = vector.load %arg7[%c2_31, %c0_32, %c0_33] : memref<3x1x128xf32, #tpu.memory_space<vmem>>, vector<1x1x128xf32>
    %35 = vector.shape_cast %34 : vector<1x1x128xf32> to vector<1x128xf32>
    %36 = vector.broadcast %35 : vector<1x128xf32> to vector<256x128xf32>
    %37 = arith.addf %33, %36 : vector<256x128xf32>
    %38 = arith.truncf %37 : vector<256x128xf32> to vector<256x128xbf16>
    %c2_34 = arith.constant 2 : index
    %c0_35 = arith.constant 0 : index
    %c0_36 = arith.constant 0 : index
    %c0_37 = arith.constant 0 : index
    %39 = vector.load %arg8[%c2_34, %c0_35, %c0_36, %c0_37] : memref<3x1x256x128xbf16, #tpu.memory_space<vmem>>, vector<1x1x256x128xbf16>
    %40 = vector.shape_cast %39 : vector<1x1x256x128xbf16> to vector<256x128xbf16>
    %41 = vector.shape_cast %38 : vector<256x128xbf16> to vector<1x1x256x128xbf16>
    tpu.vector_store %arg8[%c2_34, %c0_35, %c0_36, %c0_37], %41 {strides = array<i32>} : memref<3x1x256x128xbf16, #tpu.memory_space<vmem>>, vector<1x1x256x128xbf16>,
    return
  }
  func.func @transform_0(%arg0: i32, %arg1: i32, %arg2: i32) -> (i32, i32, i32) {
    %c0_i32 = arith.constant 0 : i32
    %c0_i32_0 = arith.constant 0 : i32
    return %arg0, %arg1, %c0_i32 : i32, i32, i32
  }
  func.func @transform_1(%arg0: i32, %arg1: i32, %arg2: i32) -> (i32, i32, i32) {
    %c0_i32 = arith.constant 0 : i32
    %c0_i32_0 = arith.constant 0 : i32
    return %arg0, %arg1, %c0_i32 : i32, i32, i32
  }
  func.func @transform_2(%arg0: i32, %arg1: i32, %arg2: i32) -> (i32, i32, i32) {
    %c0_i32 = arith.constant 0 : i32
    %c0_i32_0 = arith.constant 0 : i32
    return %arg0, %arg1, %c0_i32 : i32, i32, i32
  }
  func.func @transform_3(%arg0: i32, %arg1: i32, %arg2: i32) -> (i32, i32, i32) {
    %c0_i32 = arith.constant 0 : i32
    %c0_i32_0 = arith.constant 0 : i32
    %c0_i32_1 = arith.constant 0 : i32
    return %c0_i32, %c0_i32_0, %arg2 : i32, i32, i32
  }
  func.func @transform_4(%arg0: i32, %arg1: i32, %arg2: i32) -> (i32, i32, i32) {
    %c0_i32 = arith.constant 0 : i32
    %c0_i32_0 = arith.constant 0 : i32
    %c0_i32_1 = arith.constant 0 : i32
    return %c0_i32, %c0_i32_0, %arg2 : i32, i32, i32
  }
  func.func @transform_5(%arg0: i32, %arg1: i32, %arg2: i32) -> (i32, i32, i32, i32) {
    %c0_i32 = arith.constant 0 : i32
    %c0_i32_0 = arith.constant 0 : i32
    return %c0_i32, %arg0, %arg1, %arg2 : i32, i32, i32, i32
  }
}

</mosaic_0001>

<llo_original>
// kernel: tpu_custom_call.1
$region0: #{tpu_custom_call.1}
  #allocation0 [shape = 'u32[]', space=smem, size = 0x4, offset = 0x4, fixed_abs, tag = 'smem constant byte address 0x4 - core index']
  #allocation1 [shape = 'u32[72,128]{1,0:T(1,128)}', space=vmem, size = 0x9000, scoped, tag = 'internal scratch']
  #allocation11 [shape = 's32[]', space=sflag, size = 0x4, offset = 0, fixed_abs, tag = 'sflag constant byte address 0x0 - dummy sync flag']
  %s0 = inlined_call_operand.hbm [shape: f32[2,256,128], index: 0, kind: input, shape index: {}]
  %s1 = inlined_call_operand.hbm [shape: f32[2,256,128], index: 1, kind: input, shape index: {}]
  %s2 = inlined_call_operand.hbm [shape: f32[2,256,128], index: 2, kind: input, shape index: {}]
  %s3 = inlined_call_operand.hbm [shape: bf16[3,128,128], index: 3, kind: input, shape index: {}]
  %s4 = inlined_call_operand.vmem [shape: f32[3,1,128], index: 4, kind: input, shape index: {}]
  %s5 = inlined_call_operand.hbm [shape: bf16[3,2,256,128], index: 5, kind: output, shape index: {}]
  %s6 = sld [smem:[#allocation0]]
  $region69: #{tpu_custom_call.1} parent=0
    _
  %s8 = ssub.s32 1, %s6
  %s9 = scalar_select 0, %s8, %s6
  $region1: #{tpu_custom_call.1} parent=0
    #allocation2 [shape = 'u8[262144]{0}', space=vmem, size = 0x40000, scoped, tag = 'input window, operand 0']
    #allocation3 [shape = 's32[2]{0}', space=sflag, size = 0x8, scoped, tag = 'scoped memory for tpu_custom_call.1']
    #allocation4 [shape = 's32[2]{0}', space=sflag, size = 0x8, scoped, tag = 'scoped memory for tpu_custom_call.1']
    #allocation5 [shape = 'u8[262144]{0}', space=vmem, size = 0x40000, scoped, tag = 'input window, operand 1']
    #allocation6 [shape = 's32[2]{0}', space=sflag, size = 0x8, scoped, tag = 'scoped memory for tpu_custom_call.1']
    #allocation7 [shape = 'u8[262144]{0}', space=vmem, size = 0x40000, scoped, tag = 'input window, operand 2']
    #allocation8 [shape = 'u8[98304]{0}', space=vmem, size = 0x18000, scoped, tag = 'input window, operand 3, single buffered']
    #allocation9 [shape = 's32[1]{0}', space=sflag, size = 0x4, scoped, tag = 'scoped memory for tpu_custom_call.1']
    #allocation10 [shape = 'u8[393216]{0}', space=vmem, size = 0x60000, scoped, tag = 'output window, operand 0']
    %10 = vsyncpa [#allocation3], 0
    %s11 = scalar_lea.sflag [#allocation3], 1
    %12 = vsyncpa %s11, 0
    %13 = vsyncpa [#allocation6], 0
    %s14 = scalar_lea.sflag [#allocation6], 1
    %15 = vsyncpa %s14, 0
    %16 = vsyncpa [#allocation9], 0
    %17 = vsyncpa [#allocation4], 0
    %s18 = scalar_lea.sflag [#allocation4], 1
    %19 = vsyncpa %s18, 0
    loop: start=0, step=1, limit=4
    $region2: #{tpu_custom_call.1} parent=1 // loop_pre_header
      _
    $region3: #{tpu_custom_call.1} parent=1 // loop_header
      %s21 = sphi 0, %s25
      %p22 = scmp.ge.s32.totalorder %s21, 4
      %s28 = sphi 0, %s47
      %s29 = sphi 0, %s43
      %s30 = sphi 0, %s39
      %s31 = sphi 0, %s28
      %s32 = sphi 0, %s29
      %s33 = sphi 0, %s30
      %s34 = sphi 0, %s31
      %s35 = sphi 0, %s32
      %s36 = sphi 0, %s33
      %s52 = sphi 0, %s54
      %s55 = sphi 0, %s52
      %s56 = sphi 0, %s55
      %s72 = sphi 0, %s56
      %s80 = sphi 0, %s82
      %s83 = sphi 0, %s80
      %s84 = sphi 0, %s83
      %s100 = sphi 0, %s84
      %s108 = sphi 0, %s110
      %s111 = sphi 0, %s108
      %s112 = sphi 0, %s111
      %s128 = sphi 0, %s112
      %s134 = sphi 0, %s136
      %s137 = sphi 0, %s134
      %s138 = sphi 0, %s137
      %s154 = sphi 0, %s138
      %s160 = sphi 0, %s162
      %s163 = sphi 0, %s160
      %s164 = sphi 0, %s163
      %s180 = sphi 0, %s164
      %s190 = sphi 0, %s192
      %s193 = sphi 0, %s190
      %s194 = sphi 0, %s193
      %s210 = sphi 0, %s194
    $region4: #{tpu_custom_call.1} parent=1 // loop_header_branch
      %24 = sbr.rel (%p22) target = $region8
    $region5: #{tpu_custom_call.1} parent=1 // loop_body
      %s26 = ssub.s32 %s21, 1
      %s27 = ssub.s32 %s21, 2
      %s37 = sadd.s32 1, %s30
      %p38 = scmp.ge.s32.totalorder %s37, 1
      %s39 = scalar_select %p38, 0, %s37
      %s40 = sadd.s32 1, %s29
      %s41 = scalar_select %p38, %s40, %s29
      %p42 = scmp.ge.s32.totalorder %s41, 1
      %s43 = scalar_select %p42, 0, %s41
      %s44 = sadd.s32 1, %s28
      %s45 = scalar_select %p42, %s44, %s28
      %p46 = scmp.ge.s32.totalorder %s45, 2
      %s47 = scalar_select %p46, 0, %s45
      %s48 = ssub.s32 %s28, %s47
      %s49 = ssub.s32 %s29, %s43
      %s50 = sor.u32 %s48, %s49
      %p51 = scmp.eq.s32.totalorder %s50, 0
      %s53 = sadd.s32 %s52, 1
      %s54 = scalar_select %p51, %s52, %s53
      %p57 = pneg %p51
      %p58 = scmp.eq.s32.totalorder %s21, 1
      %p59 = por %p57, %p58
      %p60 = scmp.ne.s32.totalorder %s52, %s55
      %p61 = scmp.eq.s32.totalorder %s21, 0
      %p62 = por %p60, %p61
      %p63 = scmp.ne.s32.totalorder %s52, %s55
      %p64 = scmp.eq.s32.totalorder %s26, 1
      %p65 = por %p63, %p64
      %p66 = scmp.ne.s32.totalorder %s55, %s56
      %p67 = scmp.eq.s32.totalorder %s26, 0
      %p68 = por %p66, %p67
      %p69 = scmp.ne.s32.totalorder %s55, %s56
      %p70 = scmp.eq.s32.totalorder %s27, 1
      %p71 = por %p69, %p70
      %p73 = scmp.ne.s32.totalorder %s56, %s72
      %p74 = scmp.eq.s32.totalorder %s27, 0
      %p75 = por %p73, %p74
      %s76 = ssub.s32 %s28, %s47
      %s77 = ssub.s32 %s29, %s43
      %s78 = sor.u32 %s76, %s77
      %p79 = scmp.eq.s32.totalorder %s78, 0
      %s81 = sadd.s32 %s80, 1
      %s82 = scalar_select %p79, %s80, %s81
      %p85 = pneg %p79
      %p86 = scmp.eq.s32.totalorder %s21, 1
      %p87 = por %p85, %p86
      %p88 = scmp.ne.s32.totalorder %s80, %s83
      %p89 = scmp.eq.s32.totalorder %s21, 0
      %p90 = por %p88, %p89
      %p91 = scmp.ne.s32.totalorder %s80, %s83
      %p92 = scmp.eq.s32.totalorder %s26, 1
      %p93 = por %p91, %p92
      %p94 = scmp.ne.s32.totalorder %s83, %s84
      %p95 = scmp.eq.s32.totalorder %s26, 0
      %p96 = por %p94, %p95
      %p97 = scmp.ne.s32.totalorder %s83, %s84
      %p98 = scmp.eq.s32.totalorder %s27, 1
      %p99 = por %p97, %p98
      %p101 = scmp.ne.s32.totalorder %s84, %s100
      %p102 = scmp.eq.s32.totalorder %s27, 0
      %p103 = por %p101, %p102
      %s104 = ssub.s32 %s28, %s47
      %s105 = ssub.s32 %s29, %s43
      %s106 = sor.u32 %s104, %s105
      %p107 = scmp.eq.s32.totalorder %s106, 0
      %s109 = sadd.s32 %s108, 1
      %s110 = scalar_select %p107, %s108, %s109
      %p113 = pneg %p107
      %p114 = scmp.eq.s32.totalorder %s21, 1
      %p115 = por %p113, %p114
      %p116 = scmp.ne.s32.totalorder %s108, %s111
      %p117 = scmp.eq.s32.totalorder %s21, 0
      %p118 = por %p116, %p117
      %p119 = scmp.ne.s32.totalorder %s108, %s111
      %p120 = scmp.eq.s32.totalorder %s26, 1
      %p121 = por %p119, %p120
      %p122 = scmp.ne.s32.totalorder %s111, %s112
      %p123 = scmp.eq.s32.totalorder %s26, 0
      %p124 = por %p122, %p123
      %p125 = scmp.ne.s32.totalorder %s111, %s112
      %p126 = scmp.eq.s32.totalorder %s27, 1
      %p127 = por %p125, %p126
      %p129 = scmp.ne.s32.totalorder %s112, %s128
      %p130 = scmp.eq.s32.totalorder %s27, 0
      %p131 = por %p129, %p130
      %s132 = ssub.s32 %s30, %s39
      %p133 = scmp.eq.s32.totalorder %s132, 0
      %s135 = sadd.s32 %s134, 1
      %s136 = scalar_select %p133, %s134, %s135
      %p139 = pneg %p133
      %p140 = scmp.eq.s32.totalorder %s21, 1
      %p141 = por %p139, %p140
      %p142 = scmp.ne.s32.totalorder %s134, %s137
      %p143 = scmp.eq.s32.totalorder %s21, 0
      %p144 = por %p142, %p143
      %p145 = scmp.ne.s32.totalorder %s134, %s137
      %p146 = scmp.eq.s32.totalorder %s26, 1
      %p147 = por %p145, %p146
      %p148 = scmp.ne.s32.totalorder %s137, %s138
      %p149 = scmp.eq.s32.totalorder %s26, 0
      %p150 = por %p148, %p149
      %p151 = scmp.ne.s32.totalorder %s137, %s138
      %p152 = scmp.eq.s32.totalorder %s27, 1
      %p153 = por %p151, %p152
      %p155 = scmp.ne.s32.totalorder %s138, %s154
      %p156 = scmp.eq.s32.totalorder %s27, 0
      %p157 = por %p155, %p156
      %s158 = ssub.s32 %s30, %s39
      %p159 = scmp.eq.s32.totalorder %s158, 0
      %s161 = sadd.s32 %s160, 1
      %s162 = scalar_select %p159, %s160, %s161
      %p165 = pneg %p159
      %p166 = scmp.eq.s32.totalorder %s21, 1
      %p167 = por %p165, %p166
      %p168 = scmp.ne.s32.totalorder %s160, %s163
      %p169 = scmp.eq.s32.totalorder %s21, 0
      %p170 = por %p168, %p169
      %p171 = scmp.ne.s32.totalorder %s160, %s163
      %p172 = scmp.eq.s32.totalorder %s26, 1
      %p173 = por %p171, %p172
      %p174 = scmp.ne.s32.totalorder %s163, %s164
      %p175 = scmp.eq.s32.totalorder %s26, 0
      %p176 = por %p174, %p175
      %p177 = scmp.ne.s32.totalorder %s163, %s164
      %p178 = scmp.eq.s32.totalorder %s27, 1
      %p179 = por %p177, %p178
      %p181 = scmp.ne.s32.totalorder %s164, %s180
      %p182 = scmp.eq.s32.totalorder %s27, 0
      %p183 = por %p181, %p182
      %s184 = ssub.s32 %s28, %s47
      %s185 = ssub.s32 %s29, %s43
      %s186 = sor.u32 %s184, %s185
      %s187 = ssub.s32 %s30, %s39
      %s188 = sor.u32 %s186, %s187
      %p189 = scmp.eq.s32.totalorder %s188, 0
      %s191 = sadd.s32 %s190, 1
      %s192 = scalar_select %p189, %s190, %s191
      %p195 = pneg %p189
      %p196 = scmp.eq.s32.totalorder %s21, 1
      %p197 = por %p195, %p196
      %p198 = scmp.ne.s32.totalorder %s190, %s193
      %p199 = scmp.eq.s32.totalorder %s21, 0
      %p200 = por %p198, %p199
      %p201 = scmp.ne.s32.totalorder %s190, %s193
      %p202 = scmp.eq.s32.totalorder %s26, 1
      %p203 = por %p201, %p202
      %p204 = scmp.ne.s32.totalorder %s193, %s194
      %p205 = scmp.eq.s32.totalorder %s26, 0
      %p206 = por %p204, %p205
      %p207 = scmp.ne.s32.totalorder %s193, %s194
      %p208 = scmp.eq.s32.totalorder %s27, 1
      %p209 = por %p207, %p208
      %p211 = scmp.ne.s32.totalorder %s194, %s210
      %p212 = scmp.eq.s32.totalorder %s27, 0
      %p213 = por %p211, %p212
      %p214 = scmp.le.s32.totalorder 1, %s21
      %p215 = scmp.lt.s32.totalorder %s21, 3
      %p216 = pnand %p214, %p215
      %p217 = pneg %p216
      // Predicated region
      $region9: #{tpu_custom_call.1} parent=5 // pred_check
        _
      $region10: #{tpu_custom_call.1} parent=5 // pred_check_branch
        %219 = sbr.rel (%p216) target = $region12
      $region11: #{tpu_custom_call.1} parent=5 // pred_region
        %s220 = ssub.s32 %s21, 1
        // Predicated region
        $region13: #{tpu_custom_call.1} parent=11 // pred_check
          %p221 = pneg %p150
        $region14: #{tpu_custom_call.1} parent=11 // pred_check_branch
          %223 = sbr.rel (%p221) target = $region16
        $region15: #{tpu_custom_call.1} parent=11 // pred_region
          %225 = vsyncadd [#allocation9], 0
          %s226 = smul.addr %s33, 4
          %s227 = scalar_lea.hbm %s3, %s226
          %s228 = sshll.u32 %s227, 4
          %s229 = int_to_ptr.hbm [resolvable:$true] %s228
          %s230 = sshll.u32 [#allocation8], 4
          %s231 = int_to_ptr.vmem [resolvable:$true] %s230
          %236 = dma.hbm_to_vmem [thread:$0]  %s229, 3072, %s231, [#allocation9], 64, 64, 4
        $region16: #{tpu_custom_call.1} parent=11 // pred_fallthru
          _
        // Predicated region
        $region17: #{tpu_custom_call.1} parent=11 // pred_check
          %p237 = pneg %p176
        $region18: #{tpu_custom_call.1} parent=11 // pred_check_branch
          %239 = sbr.rel (%p237) target = $region20
        $region19: #{tpu_custom_call.1} parent=11 // pred_region
          %p240 = scmp.lt.s32.totalorder %s33, 0
          %s241 = scalar_select %p240, %s33, 0
          %s242 = scalar_lea.vmem %s4, %s241
        $region20: #{tpu_custom_call.1} parent=11 // pred_fallthru
          _
      $region12: #{tpu_custom_call.1} parent=5 // pred_fallthru
        _
      %p243 = scmp.lt.s32.totalorder %s21, 2
      // Predicated region
      $region21: #{tpu_custom_call.1} parent=5 // pred_check
        %p244 = pneg %p243
      $region22: #{tpu_custom_call.1} parent=5 // pred_check_branch
        %246 = sbr.rel (%p244) target = $region24
      $region23: #{tpu_custom_call.1} parent=5 // pred_region
        // Predicated region
        $region25: #{tpu_custom_call.1} parent=23 // pred_check
          %p247 = pneg %p62
        $region26: #{tpu_custom_call.1} parent=23 // pred_check_branch
          %249 = sbr.rel (%p247) target = $region28
        $region27: #{tpu_custom_call.1} parent=23 // pred_region
          %s250 = sand.u32 %s52, 1
          %s251 = scalar_lea.sflag [#allocation3], %s250
          %s252 = sand.u32 %s52, 1
          %s253 = smul.addr %s252, 256
          %s254 = scalar_lea.vmem [#allocation2], %s253
          %s255 = smul.u32 32, %s29
          %257 = vsyncadd %s251, 0
          %s258 = smul.addr %s28, 32
          %s259 = sadd.s32 %s255, %s258
          %s260 = smul.addr %s259, 8
          %s261 = scalar_lea.hbm %s0, %s260
          %s262 = sshll.u32 %s261, 4
          %s263 = int_to_ptr.hbm [resolvable:$true] %s262
          %s264 = sshll.u32 %s254, 4
          %s265 = int_to_ptr.vmem [resolvable:$true] %s264
          %270 = dma.hbm_to_vmem [thread:$0]  %s263, 4096, %s265, %s251, 128, 128, 8
        $region28: #{tpu_custom_call.1} parent=23 // pred_fallthru
          _
        // Predicated region
        $region29: #{tpu_custom_call.1} parent=23 // pred_check
          %p271 = pneg %p90
        $region30: #{tpu_custom_call.1} parent=23 // pred_check_branch
          %273 = sbr.rel (%p271) target = $region32
        $region31: #{tpu_custom_call.1} parent=23 // pred_region
          %s274 = sand.u32 %s21, 1
          %s275 = scalar_lea.sflag [#allocation6], %s274
          %s276 = sand.u32 %s80, 1
          %s277 = smul.addr %s276, 256
          %s278 = scalar_lea.vmem [#allocation5], %s277
          %s279 = smul.u32 32, %s29
          %281 = vsyncadd %s275, 0
          %s282 = smul.addr %s28, 32
          %s283 = sadd.s32 %s279, %s282
          %s284 = smul.addr %s283, 8
          %s285 = scalar_lea.hbm %s1, %s284
          %s286 = sshll.u32 %s285, 4
          %s287 = int_to_ptr.hbm [resolvable:$true] %s286
          %s288 = sshll.u32 %s278, 4
          %s289 = int_to_ptr.vmem [resolvable:$true] %s288
          %294 = dma.hbm_to_vmem [thread:$0]  %s287, 4096, %s289, %s275, 128, 128, 8
        $region32: #{tpu_custom_call.1} parent=23 // pred_fallthru
          _
        // Predicated region
        $region33: #{tpu_custom_call.1} parent=23 // pred_check
          %p295 = pneg %p118
        $region34: #{tpu_custom_call.1} parent=23 // pred_check_branch
          %297 = sbr.rel (%p295) target = $region36
        $region35: #{tpu_custom_call.1} parent=23 // pred_region
          %s298 = sand.u32 %s21, 1
          %s299 = scalar_lea.sflag [#allocation6], %s298
          %s300 = sand.u32 %s108, 1
          %s301 = smul.addr %s300, 256
          %s302 = scalar_lea.vmem [#allocation7], %s301
          %s303 = smul.u32 32, %s29
          %305 = vsyncadd %s299, 0
          %s306 = smul.addr %s28, 32
          %s307 = sadd.s32 %s303, %s306
          %s308 = smul.addr %s307, 8
          %s309 = scalar_lea.hbm %s2, %s308
          %s310 = sshll.u32 %s309, 4
          %s311 = int_to_ptr.hbm [resolvable:$true] %s310
          %s312 = sshll.u32 %s302, 4
          %s313 = int_to_ptr.vmem [resolvable:$true] %s312
          %318 = dma.hbm_to_vmem [thread:$0]  %s311, 4096, %s313, %s299, 128, 128, 8
        $region36: #{tpu_custom_call.1} parent=23 // pred_fallthru
          _
      $region24: #{tpu_custom_call.1} parent=5 // pred_fallthru
        _
      %p319 = scmp.le.s32.totalorder 1, %s21
      %p320 = scmp.lt.s32.totalorder %s21, 3
      %p321 = pnand %p319, %p320
      %p322 = pneg %p321
      // Predicated region
      $region37: #{tpu_custom_call.1} parent=5 // pred_check
        _
      $region38: #{tpu_custom_call.1} parent=5 // pred_check_branch
        %324 = sbr.rel (%p321) target = $region40
      $region39: #{tpu_custom_call.1} parent=5 // pred_region
        %s325 = ssub.s32 %s21, 1
        %s326 = sand.u32 %s55, 1
        %s327 = scalar_lea.sflag [#allocation3], %s326
        %s328 = sand.u32 %s55, 1
        %s329 = smul.addr %s328, 256
        %s330 = scalar_lea.vmem [#allocation2], %s329
        // Predicated region
        $region41: #{tpu_custom_call.1} parent=39 // pred_check
          %p331 = pneg %p68
        $region42: #{tpu_custom_call.1} parent=39 // pred_check_branch
          %333 = sbr.rel (%p331) target = $region44
        $region43: #{tpu_custom_call.1} parent=39 // pred_region
          %335 = dma.done %s327, 4096
        $region44: #{tpu_custom_call.1} parent=39 // pred_fallthru
          _
        %s336 = sand.u32 %s26, 1
        %s337 = scalar_lea.sflag [#allocation6], %s336
        %s338 = sand.u32 %s83, 1
        %s339 = smul.addr %s338, 256
        %s340 = scalar_lea.vmem [#allocation5], %s339
        // Predicated region
        $region45: #{tpu_custom_call.1} parent=39 // pred_check
          %p341 = pneg %p96
        $region46: #{tpu_custom_call.1} parent=39 // pred_check_branch
          %343 = sbr.rel (%p341) target = $region48
        $region47: #{tpu_custom_call.1} parent=39 // pred_region
          %345 = dma.done %s337, 4096
        $region48: #{tpu_custom_call.1} parent=39 // pred_fallthru
          _
        %s346 = sand.u32 %s26, 1
        %s347 = scalar_lea.sflag [#allocation6], %s346
        %s348 = sand.u32 %s111, 1
        %s349 = smul.addr %s348, 256
        %s350 = scalar_lea.vmem [#allocation7], %s349
        // Predicated region
        $region49: #{tpu_custom_call.1} parent=39 // pred_check
          %p351 = pneg %p124
        $region50: #{tpu_custom_call.1} parent=39 // pred_check_branch
          %353 = sbr.rel (%p351) target = $region52
        $region51: #{tpu_custom_call.1} parent=39 // pred_region
          %355 = dma.done %s347, 4096
        $region52: #{tpu_custom_call.1} parent=39 // pred_fallthru
          _
        // Predicated region
        $region53: #{tpu_custom_call.1} parent=39 // pred_check
          %p356 = pneg %p150
        $region54: #{tpu_custom_call.1} parent=39 // pred_check_branch
          %358 = sbr.rel (%p356) target = $region56
        $region55: #{tpu_custom_call.1} parent=39 // pred_region
          %360 = dma.done [#allocation9], 3072
        $region56: #{tpu_custom_call.1} parent=39 // pred_fallthru
          _
        %s361 = sand.u32 %s55, 1
        %s362 = scalar_lea.sflag [#allocation3], %s361
        %s363 = sand.u32 %s55, 1
        %s364 = smul.addr %s363, 256
        %s365 = scalar_lea.vmem [#allocation2], %s364
        %p366 = pneg %p68
        %p367 = pneg %p65
        %s368 = sand.u32 %s26, 1
        %s369 = scalar_lea.sflag [#allocation6], %s368
        %s370 = sand.u32 %s83, 1
        %s371 = smul.addr %s370, 256
        %s372 = scalar_lea.vmem [#allocation5], %s371
        %p373 = pneg %p96
        %p374 = pneg %p93
        %s375 = sand.u32 %s26, 1
        %s376 = scalar_lea.sflag [#allocation6], %s375
        %s377 = sand.u32 %s111, 1
        %s378 = smul.addr %s377, 256
        %s379 = scalar_lea.vmem [#allocation7], %s378
        %p380 = pneg %p124
        %p381 = pneg %p121
        %p382 = pneg %p150
        %p383 = pneg %p147
        %p384 = scmp.lt.s32.totalorder %s33, 0
        %s385 = scalar_select %p384, %s33, 0
        %s386 = scalar_lea.vmem %s4, %s385
        %p387 = pneg %p176
        %p388 = pneg %p173
        %p389 = pneg %p206
        %p390 = pneg %p203
        %s391 = sand.u32 %s193, 1
        %s392 = scalar_lea.sflag [#allocation4], %s391
        %s393 = sand.u32 %s193, 1
        %s394 = smul.addr %s393, 384
        %s395 = scalar_lea.vmem [#allocation10], %s394
        %s396 = smul.u32 32, %s32
        %s397 = smul.u32 32, %s32
        %s398 = smul.u32 32, %s32
        %p399 = scmp.lt.s32.totalorder %s33, 0
        %s400 = scalar_select %p399, %s33, 0
        %s401 = scalar_lea.vmem %s4, %s400
        %s402 = smul.u32 32, %s32
        %v403 = vld [vmem:[%s330] sm:$0xff]
        %v404 = vld [vmem:[%s330 + $0x8] sm:$0xff]
        %v405 = vld [vmem:[%s330 + $0x10] sm:$0xff]
        %v406 = vld [vmem:[%s330 + $0x18] sm:$0xff]
        %v407 = vld [vmem:[%s330 + $0x20] sm:$0xff]
        %v408 = vld [vmem:[%s330 + $0x28] sm:$0xff]
        %v409 = vld [vmem:[%s330 + $0x30] sm:$0xff]
        %v410 = vld [vmem:[%s330 + $0x38] sm:$0xff]
        %v411 = vld [vmem:[%s330 + $0x40] sm:$0xff]
        %v412 = vld [vmem:[%s330 + $0x48] sm:$0xff]
        %v413 = vld [vmem:[%s330 + $0x50] sm:$0xff]
        %v414 = vld [vmem:[%s330 + $0x58] sm:$0xff]
        %v415 = vld [vmem:[%s330 + $0x60] sm:$0xff]
        %v416 = vld [vmem:[%s330 + $0x68] sm:$0xff]
        %v417 = vld [vmem:[%s330 + $0x70] sm:$0xff]
        %v418 = vld [vmem:[%s330 + $0x78] sm:$0xff]
        %v419 = vld [vmem:[%s330 + $0x80] sm:$0xff]
        %v420 = vld [vmem:[%s330 + $0x88] sm:$0xff]
        %v421 = vld [vmem:[%s330 + $0x90] sm:$0xff]
        %v422 = vld [vmem:[%s330 + $0x98] sm:$0xff]
        %v423 = vld [vmem:[%s330 + $0xa0] sm:$0xff]
        %v424 = vld [vmem:[%s330 + $0xa8] sm:$0xff]
        %v425 = vld [vmem:[%s330 + $0xb0] sm:$0xff]
        %v426 = vld [vmem:[%s330 + $0xb8] sm:$0xff]
        %v427 = vld [vmem:[%s330 + $0xc0] sm:$0xff]
        %v428 = vld [vmem:[%s330 + $0xc8] sm:$0xff]
        %v429 = vld [vmem:[%s330 + $0xd0] sm:$0xff]
        %v430 = vld [vmem:[%s330 + $0xd8] sm:$0xff]
        %v431 = vld [vmem:[%s330 + $0xe0] sm:$0xff]
        %v432 = vld [vmem:[%s330 + $0xe8] sm:$0xff]
        %v433 = vld [vmem:[%s330 + $0xf0] sm:$0xff]
        %v434 = vld [vmem:[%s330 + $0xf8] sm:$0xff]
        %v435 = vpack.c.bf16 %v404, %v403
        %v436 = vpack.c.bf16 %v406, %v405
        %v437 = vpack.c.bf16 %v408, %v407
        %v438 = vpack.c.bf16 %v410, %v409
        %v439 = vpack.c.bf16 %v412, %v411
        %v440 = vpack.c.bf16 %v414, %v413
        %v441 = vpack.c.bf16 %v416, %v415
        %v442 = vpack.c.bf16 %v418, %v417
        %v443 = vpack.c.bf16 %v420, %v419
        %v444 = vpack.c.bf16 %v422, %v421
        %v445 = vpack.c.bf16 %v424, %v423
        %v446 = vpack.c.bf16 %v426, %v425
        %v447 = vpack.c.bf16 %v428, %v427
        %v448 = vpack.c.bf16 %v430, %v429
        %v449 = vpack.c.bf16 %v432, %v431
        %v450 = vpack.c.bf16 %v434, %v433
        %v451 = vld [vmem:[#allocation8] sm:$0xf]
        %v452 = vld [vmem:[#allocation8 + $0x4] sm:$0xf]
        %v453 = vld [vmem:[#allocation8 + $0x8] sm:$0xf]
        %v454 = vld [vmem:[#allocation8 + $0xc] sm:$0xf]
        %v455 = vld [vmem:[#allocation8 + $0x10] sm:$0xf]
        %v456 = vld [vmem:[#allocation8 + $0x14] sm:$0xf]
        %v457 = vld [vmem:[#allocation8 + $0x18] sm:$0xf]
        %v458 = vld [vmem:[#allocation8 + $0x1c] sm:$0xf]
        %v459 = vld [vmem:[#allocation8 + $0x20] sm:$0xf]
        %v460 = vld [vmem:[#allocation8 + $0x24] sm:$0xf]
        %v461 = vld [vmem:[#allocation8 + $0x28] sm:$0xf]
        %v462 = vld [vmem:[#allocation8 + $0x2c] sm:$0xf]
        %v463 = vld [vmem:[#allocation8 + $0x30] sm:$0xf]
        %v464 = vld [vmem:[#allocation8 + $0x34] sm:$0xf]
        %v465 = vld [vmem:[#allocation8 + $0x38] sm:$0xf]
        %v466 = vld [vmem:[#allocation8 + $0x3c] sm:$0xf]
        %v467 = vld [vmem:[%s401] sm:$0x1]
        %v469 = vperm.slane %v467, 0
        %v487 = vunpack.c.l.b16 %v451
        %v488 = vunpack.c.l.b16 %v452
        %v489 = vunpack.c.l.b16 %v453
        %v490 = vunpack.c.l.b16 %v454
        %v491 = vunpack.c.l.b16 %v455
        %v492 = vunpack.c.l.b16 %v456
        %v493 = vunpack.c.l.b16 %v457
        %v494 = vunpack.c.l.b16 %v458
        %v495 = vunpack.c.l.b16 %v459
        %v496 = vunpack.c.l.b16 %v460
        %v497 = vunpack.c.l.b16 %v461
        %v498 = vunpack.c.l.b16 %v462
        %v499 = vunpack.c.l.b16 %v463
        %v500 = vunpack.c.l.b16 %v464
        %v501 = vunpack.c.l.b16 %v465
        %v502 = vunpack.c.l.b16 %v466
        %v503 = vpack.c.b16 %v488, %v487
        %v504 = vpack.c.b16 %v490, %v489
        %v505 = vpack.c.b16 %v492, %v491
        %v506 = vpack.c.b16 %v494, %v493
        %v507 = vpack.c.b16 %v496, %v495
        %v508 = vpack.c.b16 %v498, %v497
        %v509 = vpack.c.b16 %v500, %v499
        %v510 = vpack.c.b16 %v502, %v501
        %519 = vmatpush.bf16.msra.mxu0 %v510
        %520 = vmatpush.bf16.msra.mxu0 %v509
        %521 = vmatpush.bf16.msra.mxu0 %v508
        %522 = vmatpush.bf16.msra.mxu0 %v507
        %523 = vmatpush.bf16.msra.mxu0 %v506
        %524 = vmatpush.bf16.msra.mxu0 %v505
        %525 = vmatpush.bf16.msra.mxu0 %v504
        %526 = vmatpush.bf16.msra.mxu0 %v503
        %527 = vmatmul.bf16.gmra.mxu0 %v435
        %v528 = vpop.f32.mrf.mxu0
        %v529 = vadd.f32 %v469, %v528
        %v530 = vpop.f32.mrf.mxu0
        %v531 = vadd.f32 %v469, %v530
        %532 = vmatmul.bf16.gmra.mxu0 %v436
        %v533 = vpop.f32.mrf.mxu0
        %v534 = vadd.f32 %v469, %v533
        %v535 = vpop.f32.mrf.mxu0
        %v536 = vadd.f32 %v469, %v535
        %537 = vmatmul.bf16.gmra.mxu0 %v437
        %v538 = vpop.f32.mrf.mxu0
        %v539 = vadd.f32 %v469, %v538
        %v540 = vpop.f32.mrf.mxu0
        %v541 = vadd.f32 %v469, %v540
        %542 = vmatmul.bf16.gmra.mxu0 %v438
        %v543 = vpop.f32.mrf.mxu0
        %v544 = vadd.f32 %v469, %v543
        %v545 = vpop.f32.mrf.mxu0
        %v546 = vadd.f32 %v469, %v545
        %547 = vmatmul.bf16.gmra.mxu0 %v439
        %v548 = vpop.f32.mrf.mxu0
        %v549 = vadd.f32 %v469, %v548
        %v550 = vpop.f32.mrf.mxu0
        %v551 = vadd.f32 %v469, %v550
        %552 = vmatmul.bf16.gmra.mxu0 %v440
        %v553 = vpop.f32.mrf.mxu0
        %v554 = vadd.f32 %v469, %v553
        %v555 = vpop.f32.mrf.mxu0
        %v556 = vadd.f32 %v469, %v555
        %557 = vmatmul.bf16.gmra.mxu0 %v441
        %v558 = vpop.f32.mrf.mxu0
        %v559 = vadd.f32 %v469, %v558
        %v560 = vpop.f32.mrf.mxu0
        %v561 = vadd.f32 %v469, %v560
        %562 = vmatmul.bf16.gmra.mxu0 %v442
        %v563 = vpop.f32.mrf.mxu0
        %v564 = vadd.f32 %v469, %v563
        %v565 = vpop.f32.mrf.mxu0
        %v566 = vadd.f32 %v469, %v565
        %567 = vmatmul.bf16.gmra.mxu0 %v443
        %v568 = vpop.f32.mrf.mxu0
        %v569 = vadd.f32 %v469, %v568
        %v570 = vpop.f32.mrf.mxu0
        %v571 = vadd.f32 %v469, %v570
        %572 = vmatmul.bf16.gmra.mxu0 %v444
        %v573 = vpop.f32.mrf.mxu0
        %v574 = vadd.f32 %v469, %v573
        %v575 = vpop.f32.mrf.mxu0
        %v576 = vadd.f32 %v469, %v575
        %577 = vmatmul.bf16.gmra.mxu0 %v445
        %v578 = vpop.f32.mrf.mxu0
        %v579 = vadd.f32 %v469, %v578
        %v580 = vpop.f32.mrf.mxu0
        %v581 = vadd.f32 %v469, %v580
        %582 = vmatmul.bf16.gmra.mxu0 %v446
        %v583 = vpop.f32.mrf.mxu0
        %v584 = vadd.f32 %v469, %v583
        %v585 = vpop.f32.mrf.mxu0
        %v586 = vadd.f32 %v469, %v585
        %587 = vmatmul.bf16.gmra.mxu0 %v447
        %v588 = vpop.f32.mrf.mxu0
        %v589 = vadd.f32 %v469, %v588
        %v590 = vpop.f32.mrf.mxu0
        %v591 = vadd.f32 %v469, %v590
        %592 = vmatmul.bf16.gmra.mxu0 %v448
        %v593 = vpop.f32.mrf.mxu0
        %v594 = vadd.f32 %v469, %v593
        %v595 = vpop.f32.mrf.mxu0
        %v596 = vadd.f32 %v469, %v595
        %597 = vmatmul.bf16.gmra.mxu0 %v449
        %v598 = vpop.f32.mrf.mxu0
        %v599 = vadd.f32 %v469, %v598
        %v600 = vpop.f32.mrf.mxu0
        %v601 = vadd.f32 %v469, %v600
        %602 = vmatmul.bf16.gmra.mxu0 %v450
        %v603 = vpop.f32.mrf.mxu0
        %v604 = vadd.f32 %v469, %v603
        %v605 = vpop.f32.mrf.mxu0
        %v606 = vadd.f32 %v469, %v605
        %607 = vdwg.mxu0
        %v608 = vpack.c.bf16 %v529, %v529
        %v609 = vpack.c.bf16 %v531, %v531
        %v610 = vpack.c.bf16 %v534, %v534
        %v611 = vpack.c.bf16 %v536, %v536
        %v612 = vpack.c.bf16 %v539, %v539
        %v613 = vpack.c.bf16 %v541, %v541
        %v614 = vpack.c.bf16 %v544, %v544
        %v615 = vpack.c.bf16 %v546, %v546
        %v616 = vpack.c.bf16 %v549, %v549
        %v617 = vpack.c.bf16 %v551, %v551
        %v618 = vpack.c.bf16 %v554, %v554
        %v619 = vpack.c.bf16 %v556, %v556
        %v620 = vpack.c.bf16 %v559, %v559
        %v621 = vpack.c.bf16 %v561, %v561
        %v622 = vpack.c.bf16 %v564, %v564
        %v623 = vpack.c.bf16 %v566, %v566
        %v624 = vpack.c.bf16 %v569, %v569
        %v625 = vpack.c.bf16 %v571, %v571
        %v626 = vpack.c.bf16 %v574, %v574
        %v627 = vpack.c.bf16 %v576, %v576
        %v628 = vpack.c.bf16 %v579, %v579
        %v629 = vpack.c.bf16 %v581, %v581
        %v630 = vpack.c.bf16 %v584, %v584
        %v631 = vpack.c.bf16 %v586, %v586
        %v632 = vpack.c.bf16 %v589, %v589
        %v633 = vpack.c.bf16 %v591, %v591
        %v634 = vpack.c.bf16 %v594, %v594
        %v635 = vpack.c.bf16 %v596, %v596
        %v636 = vpack.c.bf16 %v599, %v599
        %v637 = vpack.c.bf16 %v601, %v601
        %v638 = vpack.c.bf16 %v604, %v604
        %v639 = vpack.c.bf16 %v606, %v606
        %640 = vst [vmem:[%s395] sm:$0xf] %v608
        %641 = vst [vmem:[%s395 + $0x4] sm:$0xf] %v609
        %642 = vst [vmem:[%s395 + $0x8] sm:$0xf] %v610
        %643 = vst [vmem:[%s395 + $0xc] sm:$0xf] %v611
        %644 = vst [vmem:[%s395 + $0x10] sm:$0xf] %v612
        %645 = vst [vmem:[%s395 + $0x14] sm:$0xf] %v613
        %646 = vst [vmem:[%s395 + $0x18] sm:$0xf] %v614
        %647 = vst [vmem:[%s395 + $0x1c] sm:$0xf] %v615
        %648 = vst [vmem:[%s395 + $0x20] sm:$0xf] %v616
        %649 = vst [vmem:[%s395 + $0x24] sm:$0xf] %v617
        %650 = vst [vmem:[%s395 + $0x28] sm:$0xf] %v618
        %651 = vst [vmem:[%s395 + $0x2c] sm:$0xf] %v619
        %652 = vst [vmem:[%s395 + $0x30] sm:$0xf] %v620
        %653 = vst [vmem:[%s395 + $0x34] sm:$0xf] %v621
        %654 = vst [vmem:[%s395 + $0x38] sm:$0xf] %v622
        %655 = vst [vmem:[%s395 + $0x3c] sm:$0xf] %v623
        %656 = vst [vmem:[%s395 + $0x40] sm:$0xf] %v624
        %657 = vst [vmem:[%s395 + $0x44] sm:$0xf] %v625
        %658 = vst [vmem:[%s395 + $0x48] sm:$0xf] %v626
        %659 = vst [vmem:[%s395 + $0x4c] sm:$0xf] %v627
        %660 = vst [vmem:[%s395 + $0x50] sm:$0xf] %v628
        %661 = vst [vmem:[%s395 + $0x54] sm:$0xf] %v629
        %662 = vst [vmem:[%s395 + $0x58] sm:$0xf] %v630
        %663 = vst [vmem:[%s395 + $0x5c] sm:$0xf] %v631
        %664 = vst [vmem:[%s395 + $0x60] sm:$0xf] %v632
        %665 = vst [vmem:[%s395 + $0x64] sm:$0xf] %v633
        %666 = vst [vmem:[%s395 + $0x68] sm:$0xf] %v634
        %667 = vst [vmem:[%s395 + $0x6c] sm:$0xf] %v635
        %668 = vst [vmem:[%s395 + $0x70] sm:$0xf] %v636
        %669 = vst [vmem:[%s395 + $0x74] sm:$0xf] %v637
        %670 = vst [vmem:[%s395 + $0x78] sm:$0xf] %v638
        %671 = vst [vmem:[%s395 + $0x7c] sm:$0xf] %v639
        %v672 = vld [vmem:[%s340] sm:$0xff]
        %v673 = vld [vmem:[%s340 + $0x8] sm:$0xff]
        %v674 = vld [vmem:[%s340 + $0x10] sm:$0xff]
        %v675 = vld [vmem:[%s340 + $0x18] sm:$0xff]
        %v676 = vld [vmem:[%s340 + $0x20] sm:$0xff]
        %v677 = vld [vmem:[%s340 + $0x28] sm:$0xff]
        %v678 = vld [vmem:[%s340 + $0x30] sm:$0xff]
        %v679 = vld [vmem:[%s340 + $0x38] sm:$0xff]
        %v680 = vld [vmem:[%s340 + $0x40] sm:$0xff]
        %v681 = vld [vmem:[%s340 + $0x48] sm:$0xff]
        %v682 = vld [vmem:[%s340 + $0x50] sm:$0xff]
        %v683 = vld [vmem:[%s340 + $0x58] sm:$0xff]
        %v684 = vld [vmem:[%s340 + $0x60] sm:$0xff]
        %v685 = vld [vmem:[%s340 + $0x68] sm:$0xff]
        %v686 = vld [vmem:[%s340 + $0x70] sm:$0xff]
        %v687 = vld [vmem:[%s340 + $0x78] sm:$0xff]
        %v688 = vld [vmem:[%s340 + $0x80] sm:$0xff]
        %v689 = vld [vmem:[%s340 + $0x88] sm:$0xff]
        %v690 = vld [vmem:[%s340 + $0x90] sm:$0xff]
        %v691 = vld [vmem:[%s340 + $0x98] sm:$0xff]
        %v692 = vld [vmem:[%s340 + $0xa0] sm:$0xff]
        %v693 = vld [vmem:[%s340 + $0xa8] sm:$0xff]
        %v694 = vld [vmem:[%s340 + $0xb0] sm:$0xff]
        %v695 = vld [vmem:[%s340 + $0xb8] sm:$0xff]
        %v696 = vld [vmem:[%s340 + $0xc0] sm:$0xff]
        %v697 = vld [vmem:[%s340 + $0xc8] sm:$0xff]
        %v698 = vld [vmem:[%s340 + $0xd0] sm:$0xff]
        %v699 = vld [vmem:[%s340 + $0xd8] sm:$0xff]
        %v700 = vld [vmem:[%s340 + $0xe0] sm:$0xff]
        %v701 = vld [vmem:[%s340 + $0xe8] sm:$0xff]
        %v702 = vld [vmem:[%s340 + $0xf0] sm:$0xff]
        %v703 = vld [vmem:[%s340 + $0xf8] sm:$0xff]
        %v704 = vpack.c.bf16 %v673, %v672
        %v705 = vpack.c.bf16 %v675, %v674
        %v706 = vpack.c.bf16 %v677, %v676
        %v707 = vpack.c.bf16 %v679, %v678
        %v708 = vpack.c.bf16 %v681, %v680
        %v709 = vpack.c.bf16 %v683, %v682
        %v710 = vpack.c.bf16 %v685, %v684
        %v711 = vpack.c.bf16 %v687, %v686
        %v712 = vpack.c.bf16 %v689, %v688
        %v713 = vpack.c.bf16 %v691, %v690
        %v714 = vpack.c.bf16 %v693, %v692
        %v715 = vpack.c.bf16 %v695, %v694
        %v716 = vpack.c.bf16 %v697, %v696
        %v717 = vpack.c.bf16 %v699, %v698
        %v718 = vpack.c.bf16 %v701, %v700
        %v719 = vpack.c.bf16 %v703, %v702
        %s720 = scalar_lea.vmem [#allocation8], 64
        %v721 = vld [vmem:[%s720] sm:$0xf]
        %v722 = vld [vmem:[%s720 + $0x4] sm:$0xf]
        %v723 = vld [vmem:[%s720 + $0x8] sm:$0xf]
        %v724 = vld [vmem:[%s720 + $0xc] sm:$0xf]
        %v725 = vld [vmem:[%s720 + $0x10] sm:$0xf]
        %v726 = vld [vmem:[%s720 + $0x14] sm:$0xf]
        %v727 = vld [vmem:[%s720 + $0x18] sm:$0xf]
        %v728 = vld [vmem:[%s720 + $0x1c] sm:$0xf]
        %v729 = vld [vmem:[%s720 + $0x20] sm:$0xf]
        %v730 = vld [vmem:[%s720 + $0x24] sm:$0xf]
        %v731 = vld [vmem:[%s720 + $0x28] sm:$0xf]
        %v732 = vld [vmem:[%s720 + $0x2c] sm:$0xf]
        %v733 = vld [vmem:[%s720 + $0x30] sm:$0xf]
        %v734 = vld [vmem:[%s720 + $0x34] sm:$0xf]
        %v735 = vld [vmem:[%s720 + $0x38] sm:$0xf]
        %v736 = vld [vmem:[%s720 + $0x3c] sm:$0xf]
        %s737 = scalar_lea.vmem %s401, 1
        %v738 = vld [vmem:[%s737] sm:$0x1]
        %v740 = vperm.slane %v738, 0
        %v758 = vunpack.c.l.b16 %v721
        %v759 = vunpack.c.l.b16 %v722
        %v760 = vunpack.c.l.b16 %v723
        %v761 = vunpack.c.l.b16 %v724
        %v762 = vunpack.c.l.b16 %v725
        %v763 = vunpack.c.l.b16 %v726
        %v764 = vunpack.c.l.b16 %v727
        %v765 = vunpack.c.l.b16 %v728
        %v766 = vunpack.c.l.b16 %v729
        %v767 = vunpack.c.l.b16 %v730
        %v768 = vunpack.c.l.b16 %v731
        %v769 = vunpack.c.l.b16 %v732
        %v770 = vunpack.c.l.b16 %v733
        %v771 = vunpack.c.l.b16 %v734
        %v772 = vunpack.c.l.b16 %v735
        %v773 = vunpack.c.l.b16 %v736
        %v774 = vpack.c.b16 %v759, %v758
        %v775 = vpack.c.b16 %v761, %v760
        %v776 = vpack.c.b16 %v763, %v762
        %v777 = vpack.c.b16 %v765, %v764
        %v778 = vpack.c.b16 %v767, %v766
        %v779 = vpack.c.b16 %v769, %v768
        %v780 = vpack.c.b16 %v771, %v770
        %v781 = vpack.c.b16 %v773, %v772
        %790 = vmatpush.bf16.msra.mxu0 %v781
        %791 = vmatpush.bf16.msra.mxu0 %v780
        %792 = vmatpush.bf16.msra.mxu0 %v779
        %793 = vmatpush.bf16.msra.mxu0 %v778
        %794 = vmatpush.bf16.msra.mxu0 %v777
        %795 = vmatpush.bf16.msra.mxu0 %v776
        %796 = vmatpush.bf16.msra.mxu0 %v775
        %797 = vmatpush.bf16.msra.mxu0 %v774
        %798 = vmatmul.bf16.gmra.mxu0 %v704
        %v799 = vpop.f32.mrf.mxu0
        %v800 = vadd.f32 %v740, %v799
        %v801 = vpop.f32.mrf.mxu0
        %v802 = vadd.f32 %v740, %v801
        %803 = vmatmul.bf16.gmra.mxu0 %v705
        %v804 = vpop.f32.mrf.mxu0
        %v805 = vadd.f32 %v740, %v804
        %v806 = vpop.f32.mrf.mxu0
        %v807 = vadd.f32 %v740, %v806
        %808 = vmatmul.bf16.gmra.mxu0 %v706
        %v809 = vpop.f32.mrf.mxu0
        %v810 = vadd.f32 %v740, %v809
        %v811 = vpop.f32.mrf.mxu0
        %v812 = vadd.f32 %v740, %v811
        %813 = vmatmul.bf16.gmra.mxu0 %v707
        %v814 = vpop.f32.mrf.mxu0
        %v815 = vadd.f32 %v740, %v814
        %v816 = vpop.f32.mrf.mxu0
        %v817 = vadd.f32 %v740, %v816
        %818 = vmatmul.bf16.gmra.mxu0 %v708
        %v819 = vpop.f32.mrf.mxu0
        %v820 = vadd.f32 %v740, %v819
        %v821 = vpop.f32.mrf.mxu0
        %v822 = vadd.f32 %v740, %v821
        %823 = vmatmul.bf16.gmra.mxu0 %v709
        %v824 = vpop.f32.mrf.mxu0
        %v825 = vadd.f32 %v740, %v824
        %v826 = vpop.f32.mrf.mxu0
        %v827 = vadd.f32 %v740, %v826
        %828 = vmatmul.bf16.gmra.mxu0 %v710
        %v829 = vpop.f32.mrf.mxu0
        %v830 = vadd.f32 %v740, %v829
        %v831 = vpop.f32.mrf.mxu0
        %v832 = vadd.f32 %v740, %v831
        %833 = vmatmul.bf16.gmra.mxu0 %v711
        %v834 = vpop.f32.mrf.mxu0
        %v835 = vadd.f32 %v740, %v834
        %v836 = vpop.f32.mrf.mxu0
        %v837 = vadd.f32 %v740, %v836
        %838 = vmatmul.bf16.gmra.mxu0 %v712
        %v839 = vpop.f32.mrf.mxu0
        %v840 = vadd.f32 %v740, %v839
        %v841 = vpop.f32.mrf.mxu0
        %v842 = vadd.f32 %v740, %v841
        %843 = vmatmul.bf16.gmra.mxu0 %v713
        %v844 = vpop.f32.mrf.mxu0
        %v845 = vadd.f32 %v740, %v844
        %v846 = vpop.f32.mrf.mxu0
        %v847 = vadd.f32 %v740, %v846
        %848 = vmatmul.bf16.gmra.mxu0 %v714
        %v849 = vpop.f32.mrf.mxu0
        %v850 = vadd.f32 %v740, %v849
        %v851 = vpop.f32.mrf.mxu0
        %v852 = vadd.f32 %v740, %v851
        %853 = vmatmul.bf16.gmra.mxu0 %v715
        %v854 = vpop.f32.mrf.mxu0
        %v855 = vadd.f32 %v740, %v854
        %v856 = vpop.f32.mrf.mxu0
        %v857 = vadd.f32 %v740, %v856
        %858 = vmatmul.bf16.gmra.mxu0 %v716
        %v859 = vpop.f32.mrf.mxu0
        %v860 = vadd.f32 %v740, %v859
        %v861 = vpop.f32.mrf.mxu0
        %v862 = vadd.f32 %v740, %v861
        %863 = vmatmul.bf16.gmra.mxu0 %v717
        %v864 = vpop.f32.mrf.mxu0
        %v865 = vadd.f32 %v740, %v864
        %v866 = vpop.f32.mrf.mxu0
        %v867 = vadd.f32 %v740, %v866
        %868 = vmatmul.bf16.gmra.mxu0 %v718
        %v869 = vpop.f32.mrf.mxu0
        %v870 = vadd.f32 %v740, %v869
        %v871 = vpop.f32.mrf.mxu0
        %v872 = vadd.f32 %v740, %v871
        %873 = vmatmul.bf16.gmra.mxu0 %v719
        %v874 = vpop.f32.mrf.mxu0
        %v875 = vadd.f32 %v740, %v874
        %v876 = vpop.f32.mrf.mxu0
        %v877 = vadd.f32 %v740, %v876
        %878 = vdwg.mxu0
        %v879 = vpack.c.bf16 %v800, %v800
        %v880 = vpack.c.bf16 %v802, %v802
        %v881 = vpack.c.bf16 %v805, %v805
        %v882 = vpack.c.bf16 %v807, %v807
        %v883 = vpack.c.bf16 %v810, %v810
        %v884 = vpack.c.bf16 %v812, %v812
        %v885 = vpack.c.bf16 %v815, %v815
        %v886 = vpack.c.bf16 %v817, %v817
        %v887 = vpack.c.bf16 %v820, %v820
        %v888 = vpack.c.bf16 %v822, %v822
        %v889 = vpack.c.bf16 %v825, %v825
        %v890 = vpack.c.bf16 %v827, %v827
        %v891 = vpack.c.bf16 %v830, %v830
        %v892 = vpack.c.bf16 %v832, %v832
        %v893 = vpack.c.bf16 %v835, %v835
        %v894 = vpack.c.bf16 %v837, %v837
        %v895 = vpack.c.bf16 %v840, %v840
        %v896 = vpack.c.bf16 %v842, %v842
        %v897 = vpack.c.bf16 %v845, %v845
        %v898 = vpack.c.bf16 %v847, %v847
        %v899 = vpack.c.bf16 %v850, %v850
        %v900 = vpack.c.bf16 %v852, %v852
        %v901 = vpack.c.bf16 %v855, %v855
        %v902 = vpack.c.bf16 %v857, %v857
        %v903 = vpack.c.bf16 %v860, %v860
        %v904 = vpack.c.bf16 %v862, %v862
        %v905 = vpack.c.bf16 %v865, %v865
        %v906 = vpack.c.bf16 %v867, %v867
        %v907 = vpack.c.bf16 %v870, %v870
        %v908 = vpack.c.bf16 %v872, %v872
        %v909 = vpack.c.bf16 %v875, %v875
        %v910 = vpack.c.bf16 %v877, %v877
        %s911 = scalar_lea.vmem %s395, 128 [#allocation10]
        %912 = vst [vmem:[%s911] sm:$0xf] %v879
        %913 = vst [vmem:[%s911 + $0x4] sm:$0xf] %v880
        %914 = vst [vmem:[%s911 + $0x8] sm:$0xf] %v881
        %915 = vst [vmem:[%s911 + $0xc] sm:$0xf] %v882
        %916 = vst [vmem:[%s911 + $0x10] sm:$0xf] %v883
        %917 = vst [vmem:[%s911 + $0x14] sm:$0xf] %v884
        %918 = vst [vmem:[%s911 + $0x18] sm:$0xf] %v885
        %919 = vst [vmem:[%s911 + $0x1c] sm:$0xf] %v886
        %920 = vst [vmem:[%s911 + $0x20] sm:$0xf] %v887
        %921 = vst [vmem:[%s911 + $0x24] sm:$0xf] %v888
        %922 = vst [vmem:[%s911 + $0x28] sm:$0xf] %v889
        %923 = vst [vmem:[%s911 + $0x2c] sm:$0xf] %v890
        %924 = vst [vmem:[%s911 + $0x30] sm:$0xf] %v891
        %925 = vst [vmem:[%s911 + $0x34] sm:$0xf] %v892
        %926 = vst [vmem:[%s911 + $0x38] sm:$0xf] %v893
        %927 = vst [vmem:[%s911 + $0x3c] sm:$0xf] %v894
        %928 = vst [vmem:[%s911 + $0x40] sm:$0xf] %v895
        %929 = vst [vmem:[%s911 + $0x44] sm:$0xf] %v896
        %930 = vst [vmem:[%s911 + $0x48] sm:$0xf] %v897
        %931 = vst [vmem:[%s911 + $0x4c] sm:$0xf] %v898
        %932 = vst [vmem:[%s911 + $0x50] sm:$0xf] %v899
        %933 = vst [vmem:[%s911 + $0x54] sm:$0xf] %v900
        %934 = vst [vmem:[%s911 + $0x58] sm:$0xf] %v901
        %935 = vst [vmem:[%s911 + $0x5c] sm:$0xf] %v902
        %936 = vst [vmem:[%s911 + $0x60] sm:$0xf] %v903
        %937 = vst [vmem:[%s911 + $0x64] sm:$0xf] %v904
        %938 = vst [vmem:[%s911 + $0x68] sm:$0xf] %v905
        %939 = vst [vmem:[%s911 + $0x6c] sm:$0xf] %v906
        %940 = vst [vmem:[%s911 + $0x70] sm:$0xf] %v907
        %941 = vst [vmem:[%s911 + $0x74] sm:$0xf] %v908
        %942 = vst [vmem:[%s911 + $0x78] sm:$0xf] %v909
        %943 = vst [vmem:[%s911 + $0x7c] sm:$0xf] %v910
        %v944 = vld [vmem:[%s350] sm:$0xff]
        %v945 = vld [vmem:[%s350 + $0x8] sm:$0xff]
        %v946 = vld [vmem:[%s350 + $0x10] sm:$0xff]
        %v947 = vld [vmem:[%s350 + $0x18] sm:$0xff]
        %v948 = vld [vmem:[%s350 + $0x20] sm:$0xff]
        %v949 = vld [vmem:[%s350 + $0x28] sm:$0xff]
        %v950 = vld [vmem:[%s350 + $0x30] sm:$0xff]
        %v951 = vld [vmem:[%s350 + $0x38] sm:$0xff]
        %v952 = vld [vmem:[%s350 + $0x40] sm:$0xff]
        %v953 = vld [vmem:[%s350 + $0x48] sm:$0xff]
        %v954 = vld [vmem:[%s350 + $0x50] sm:$0xff]
        %v955 = vld [vmem:[%s350 + $0x58] sm:$0xff]
        %v956 = vld [vmem:[%s350 + $0x60] sm:$0xff]
        %v957 = vld [vmem:[%s350 + $0x68] sm:$0xff]
        %v958 = vld [vmem:[%s350 + $0x70] sm:$0xff]
        %v959 = vld [vmem:[%s350 + $0x78] sm:$0xff]
        %v960 = vld [vmem:[%s350 + $0x80] sm:$0xff]
        %v961 = vld [vmem:[%s350 + $0x88] sm:$0xff]
        %v962 = vld [vmem:[%s350 + $0x90] sm:$0xff]
        %v963 = vld [vmem:[%s350 + $0x98] sm:$0xff]
        %v964 = vld [vmem:[%s350 + $0xa0] sm:$0xff]
        %v965 = vld [vmem:[%s350 + $0xa8] sm:$0xff]
        %v966 = vld [vmem:[%s350 + $0xb0] sm:$0xff]
        %v967 = vld [vmem:[%s350 + $0xb8] sm:$0xff]
        %v968 = vld [vmem:[%s350 + $0xc0] sm:$0xff]
        %v969 = vld [vmem:[%s350 + $0xc8] sm:$0xff]
        %v970 = vld [vmem:[%s350 + $0xd0] sm:$0xff]
        %v971 = vld [vmem:[%s350 + $0xd8] sm:$0xff]
        %v972 = vld [vmem:[%s350 + $0xe0] sm:$0xff]
        %v973 = vld [vmem:[%s350 + $0xe8] sm:$0xff]
        %v974 = vld [vmem:[%s350 + $0xf0] sm:$0xff]
        %v975 = vld [vmem:[%s350 + $0xf8] sm:$0xff]
        %v976 = vpack.c.bf16 %v945, %v944
        %v977 = vpack.c.bf16 %v947, %v946
        %v978 = vpack.c.bf16 %v949, %v948
        %v979 = vpack.c.bf16 %v951, %v950
        %v980 = vpack.c.bf16 %v953, %v952
        %v981 = vpack.c.bf16 %v955, %v954
        %v982 = vpack.c.bf16 %v957, %v956
        %v983 = vpack.c.bf16 %v959, %v958
        %v984 = vpack.c.bf16 %v961, %v960
        %v985 = vpack.c.bf16 %v963, %v962
        %v986 = vpack.c.bf16 %v965, %v964
        %v987 = vpack.c.bf16 %v967, %v966
        %v988 = vpack.c.bf16 %v969, %v968
        %v989 = vpack.c.bf16 %v971, %v970
        %v990 = vpack.c.bf16 %v973, %v972
        %v991 = vpack.c.bf16 %v975, %v974
        %s992 = scalar_lea.vmem [#allocation8], 128
        %v993 = vld [vmem:[%s992] sm:$0xf]
        %v994 = vld [vmem:[%s992 + $0x4] sm:$0xf]
        %v995 = vld [vmem:[%s992 + $0x8] sm:$0xf]
        %v996 = vld [vmem:[%s992 + $0xc] sm:$0xf]
        %v997 = vld [vmem:[%s992 + $0x10] sm:$0xf]
        %v998 = vld [vmem:[%s992 + $0x14] sm:$0xf]
        %v999 = vld [vmem:[%s992 + $0x18] sm:$0xf]
        %v1000 = vld [vmem:[%s992 + $0x1c] sm:$0xf]
        %v1001 = vld [vmem:[%s992 + $0x20] sm:$0xf]
        %v1002 = vld [vmem:[%s992 + $0x24] sm:$0xf]
        %v1003 = vld [vmem:[%s992 + $0x28] sm:$0xf]
        %v1004 = vld [vmem:[%s992 + $0x2c] sm:$0xf]
        %v1005 = vld [vmem:[%s992 + $0x30] sm:$0xf]
        %v1006 = vld [vmem:[%s992 + $0x34] sm:$0xf]
        %v1007 = vld [vmem:[%s992 + $0x38] sm:$0xf]
        %v1008 = vld [vmem:[%s992 + $0x3c] sm:$0xf]
        %s1009 = scalar_lea.vmem %s401, 2
        %v1010 = vld [vmem:[%s1009] sm:$0x1]
        %v1012 = vperm.slane %v1010, 0
        %v1030 = vunpack.c.l.b16 %v993
        %v1031 = vunpack.c.l.b16 %v994
        %v1032 = vunpack.c.l.b16 %v995
        %v1033 = vunpack.c.l.b16 %v996
        %v1034 = vunpack.c.l.b16 %v997
        %v1035 = vunpack.c.l.b16 %v998
        %v1036 = vunpack.c.l.b16 %v999
        %v1037 = vunpack.c.l.b16 %v1000
        %v1038 = vunpack.c.l.b16 %v1001
        %v1039 = vunpack.c.l.b16 %v1002
        %v1040 = vunpack.c.l.b16 %v1003
        %v1041 = vunpack.c.l.b16 %v1004
        %v1042 = vunpack.c.l.b16 %v1005
        %v1043 = vunpack.c.l.b16 %v1006
        %v1044 = vunpack.c.l.b16 %v1007
        %v1045 = vunpack.c.l.b16 %v1008
        %v1046 = vpack.c.b16 %v1031, %v1030
        %v1047 = vpack.c.b16 %v1033, %v1032
        %v1048 = vpack.c.b16 %v1035, %v1034
        %v1049 = vpack.c.b16 %v1037, %v1036
        %v1050 = vpack.c.b16 %v1039, %v1038
        %v1051 = vpack.c.b16 %v1041, %v1040
        %v1052 = vpack.c.b16 %v1043, %v1042
        %v1053 = vpack.c.b16 %v1045, %v1044
        %1062 = vmatpush.bf16.msra.mxu0 %v1053
        %1063 = vmatpush.bf16.msra.mxu0 %v1052
        %1064 = vmatpush.bf16.msra.mxu0 %v1051
        %1065 = vmatpush.bf16.msra.mxu0 %v1050
        %1066 = vmatpush.bf16.msra.mxu0 %v1049
        %1067 = vmatpush.bf16.msra.mxu0 %v1048
        %1068 = vmatpush.bf16.msra.mxu0 %v1047
        %1069 = vmatpush.bf16.msra.mxu0 %v1046
        %1070 = vmatmul.bf16.gmra.mxu0 %v976
        %v1071 = vpop.f32.mrf.mxu0
        %v1072 = vadd.f32 %v1012, %v1071
        %v1073 = vpop.f32.mrf.mxu0
        %v1074 = vadd.f32 %v1012, %v1073
        %1075 = vmatmul.bf16.gmra.mxu0 %v977
        %v1076 = vpop.f32.mrf.mxu0
        %v1077 = vadd.f32 %v1012, %v1076
        %v1078 = vpop.f32.mrf.mxu0
        %v1079 = vadd.f32 %v1012, %v1078
        %1080 = vmatmul.bf16.gmra.mxu0 %v978
        %v1081 = vpop.f32.mrf.mxu0
        %v1082 = vadd.f32 %v1012, %v1081
        %v1083 = vpop.f32.mrf.mxu0
        %v1084 = vadd.f32 %v1012, %v1083
        %1085 = vmatmul.bf16.gmra.mxu0 %v979
        %v1086 = vpop.f32.mrf.mxu0
        %v1087 = vadd.f32 %v1012, %v1086
        %v1088 = vpop.f32.mrf.mxu0
        %v1089 = vadd.f32 %v1012, %v1088
        %1090 = vmatmul.bf16.gmra.mxu0 %v980
        %v1091 = vpop.f32.mrf.mxu0
        %v1092 = vadd.f32 %v1012, %v1091
        %v1093 = vpop.f32.mrf.mxu0
        %v1094 = vadd.f32 %v1012, %v1093
        %1095 = vmatmul.bf16.gmra.mxu0 %v981
        %v1096 = vpop.f32.mrf.mxu0
        %v1097 = vadd.f32 %v1012, %v1096
        %v1098 = vpop.f32.mrf.mxu0
        %v1099 = vadd.f32 %v1012, %v1098
        %1100 = vmatmul.bf16.gmra.mxu0 %v982
        %v1101 = vpop.f32.mrf.mxu0
        %v1102 = vadd.f32 %v1012, %v1101
        %v1103 = vpop.f32.mrf.mxu0
        %v1104 = vadd.f32 %v1012, %v1103
        %1105 = vmatmul.bf16.gmra.mxu0 %v983
        %v1106 = vpop.f32.mrf.mxu0
        %v1107 = vadd.f32 %v1012, %v1106
        %v1108 = vpop.f32.mrf.mxu0
        %v1109 = vadd.f32 %v1012, %v1108
        %1110 = vmatmul.bf16.gmra.mxu0 %v984
        %v1111 = vpop.f32.mrf.mxu0
        %v1112 = vadd.f32 %v1012, %v1111
        %v1113 = vpop.f32.mrf.mxu0
        %v1114 = vadd.f32 %v1012, %v1113
        %1115 = vmatmul.bf16.gmra.mxu0 %v985
        %v1116 = vpop.f32.mrf.mxu0
        %v1117 = vadd.f32 %v1012, %v1116
        %v1118 = vpop.f32.mrf.mxu0
        %v1119 = vadd.f32 %v1012, %v1118
        %1120 = vmatmul.bf16.gmra.mxu0 %v986
        %v1121 = vpop.f32.mrf.mxu0
        %v1122 = vadd.f32 %v1012, %v1121
        %v1123 = vpop.f32.mrf.mxu0
        %v1124 = vadd.f32 %v1012, %v1123
        %1125 = vmatmul.bf16.gmra.mxu0 %v987
        %v1126 = vpop.f32.mrf.mxu0
        %v1127 = vadd.f32 %v1012, %v1126
        %v1128 = vpop.f32.mrf.mxu0
        %v1129 = vadd.f32 %v1012, %v1128
        %1130 = vmatmul.bf16.gmra.mxu0 %v988
        %v1131 = vpop.f32.mrf.mxu0
        %v1132 = vadd.f32 %v1012, %v1131
        %v1133 = vpop.f32.mrf.mxu0
        %v1134 = vadd.f32 %v1012, %v1133
        %1135 = vmatmul.bf16.gmra.mxu0 %v989
        %v1136 = vpop.f32.mrf.mxu0
        %v1137 = vadd.f32 %v1012, %v1136
        %v1138 = vpop.f32.mrf.mxu0
        %v1139 = vadd.f32 %v1012, %v1138
        %1140 = vmatmul.bf16.gmra.mxu0 %v990
        %v1141 = vpop.f32.mrf.mxu0
        %v1142 = vadd.f32 %v1012, %v1141
        %v1143 = vpop.f32.mrf.mxu0
        %v1144 = vadd.f32 %v1012, %v1143
        %1145 = vmatmul.bf16.gmra.mxu0 %v991
        %v1146 = vpop.f32.mrf.mxu0
        %v1147 = vadd.f32 %v1012, %v1146
        %v1148 = vpop.f32.mrf.mxu0
        %v1149 = vadd.f32 %v1012, %v1148
        %1150 = vdwg.mxu0
        %v1151 = vpack.c.bf16 %v1072, %v1072
        %v1152 = vpack.c.bf16 %v1074, %v1074
        %v1153 = vpack.c.bf16 %v1077, %v1077
        %v1154 = vpack.c.bf16 %v1079, %v1079
        %v1155 = vpack.c.bf16 %v1082, %v1082
        %v1156 = vpack.c.bf16 %v1084, %v1084
        %v1157 = vpack.c.bf16 %v1087, %v1087
        %v1158 = vpack.c.bf16 %v1089, %v1089
        %v1159 = vpack.c.bf16 %v1092, %v1092
        %v1160 = vpack.c.bf16 %v1094, %v1094
        %v1161 = vpack.c.bf16 %v1097, %v1097
        %v1162 = vpack.c.bf16 %v1099, %v1099
        %v1163 = vpack.c.bf16 %v1102, %v1102
        %v1164 = vpack.c.bf16 %v1104, %v1104
        %v1165 = vpack.c.bf16 %v1107, %v1107
        %v1166 = vpack.c.bf16 %v1109, %v1109
        %v1167 = vpack.c.bf16 %v1112, %v1112
        %v1168 = vpack.c.bf16 %v1114, %v1114
        %v1169 = vpack.c.bf16 %v1117, %v1117
        %v1170 = vpack.c.bf16 %v1119, %v1119
        %v1171 = vpack.c.bf16 %v1122, %v1122
        %v1172 = vpack.c.bf16 %v1124, %v1124
        %v1173 = vpack.c.bf16 %v1127, %v1127
        %v1174 = vpack.c.bf16 %v1129, %v1129
        %v1175 = vpack.c.bf16 %v1132, %v1132
        %v1176 = vpack.c.bf16 %v1134, %v1134
        %v1177 = vpack.c.bf16 %v1137, %v1137
        %v1178 = vpack.c.bf16 %v1139, %v1139
        %v1179 = vpack.c.bf16 %v1142, %v1142
        %v1180 = vpack.c.bf16 %v1144, %v1144
        %v1181 = vpack.c.bf16 %v1147, %v1147
        %v1182 = vpack.c.bf16 %v1149, %v1149
        %s1183 = scalar_lea.vmem %s395, 256 [#allocation10]
        %1184 = vst [vmem:[%s1183] sm:$0xf] %v1151
        %1185 = vst [vmem:[%s1183 + $0x4] sm:$0xf] %v1152
        %1186 = vst [vmem:[%s1183 + $0x8] sm:$0xf] %v1153
        %1187 = vst [vmem:[%s1183 + $0xc] sm:$0xf] %v1154
        %1188 = vst [vmem:[%s1183 + $0x10] sm:$0xf] %v1155
        %1189 = vst [vmem:[%s1183 + $0x14] sm:$0xf] %v1156
        %1190 = vst [vmem:[%s1183 + $0x18] sm:$0xf] %v1157
        %1191 = vst [vmem:[%s1183 + $0x1c] sm:$0xf] %v1158
        %1192 = vst [vmem:[%s1183 + $0x20] sm:$0xf] %v1159
        %1193 = vst [vmem:[%s1183 + $0x24] sm:$0xf] %v1160
        %1194 = vst [vmem:[%s1183 + $0x28] sm:$0xf] %v1161
        %1195 = vst [vmem:[%s1183 + $0x2c] sm:$0xf] %v1162
        %1196 = vst [vmem:[%s1183 + $0x30] sm:$0xf] %v1163
        %1197 = vst [vmem:[%s1183 + $0x34] sm:$0xf] %v1164
        %1198 = vst [vmem:[%s1183 + $0x38] sm:$0xf] %v1165
        %1199 = vst [vmem:[%s1183 + $0x3c] sm:$0xf] %v1166
        %1200 = vst [vmem:[%s1183 + $0x40] sm:$0xf] %v1167
        %1201 = vst [vmem:[%s1183 + $0x44] sm:$0xf] %v1168
        %1202 = vst [vmem:[%s1183 + $0x48] sm:$0xf] %v1169
        %1203 = vst [vmem:[%s1183 + $0x4c] sm:$0xf] %v1170
        %1204 = vst [vmem:[%s1183 + $0x50] sm:$0xf] %v1171
        %1205 = vst [vmem:[%s1183 + $0x54] sm:$0xf] %v1172
        %1206 = vst [vmem:[%s1183 + $0x58] sm:$0xf] %v1173
        %1207 = vst [vmem:[%s1183 + $0x5c] sm:$0xf] %v1174
        %1208 = vst [vmem:[%s1183 + $0x60] sm:$0xf] %v1175
        %1209 = vst [vmem:[%s1183 + $0x64] sm:$0xf] %v1176
        %1210 = vst [vmem:[%s1183 + $0x68] sm:$0xf] %v1177
        %1211 = vst [vmem:[%s1183 + $0x6c] sm:$0xf] %v1178
        %1212 = vst [vmem:[%s1183 + $0x70] sm:$0xf] %v1179
        %1213 = vst [vmem:[%s1183 + $0x74] sm:$0xf] %v1180
        %1214 = vst [vmem:[%s1183 + $0x78] sm:$0xf] %v1181
        %1215 = vst [vmem:[%s1183 + $0x7c] sm:$0xf] %v1182
        %s1216 = sand.u32 %s193, 1
        %s1217 = scalar_lea.sflag [#allocation4], %s1216
        %s1218 = sand.u32 %s193, 1
        %s1219 = smul.addr %s1218, 384
        %s1220 = scalar_lea.vmem [#allocation10], %s1219
        // Predicated region
        $region57: #{tpu_custom_call.1} parent=39 // pred_check
          %p1221 = pneg %p203
        $region58: #{tpu_custom_call.1} parent=39 // pred_check_branch
          %1223 = sbr.rel (%p1221) target = $region60
        $region59: #{tpu_custom_call.1} parent=39 // pred_region
          #allocation12 [shape = 'u32[6]{0}', space=smem, size = 0x18, scoped, tag = 'DMA stride descriptor']
          %s1224 = smul.u32 32, %s32
          %1226 = vsyncadd %s1217, 0
          %s1227 = sadd.s32 %s33, %s1224
          %s1228 = smul.addr %s31, 32
          %s1229 = sadd.s32 %s1227, %s1228
          %s1230 = smul.addr %s1229, 4
          %s1231 = scalar_lea.hbm %s5, %s1230
          %s1233 = sshll.u32 1, 14
          %s1234 = sxor.u32 4294967295, %s1233
          %s1237 = sshll.u32 7, 18
          %s1238 = sxor.u32 4294967295, %s1237
          %s1239 = sand.u32 0, %s1238
          %s1241 = sor.u32 %s1239, 0
          %s1242 = sshll.u32 %s1220, 4
          %s1243 = int_to_ptr.vmem [resolvable:$true] %s1242
          %s1244 = sshll.u32 %s1231, 4
          %s1245 = int_to_ptr.hbm [resolvable:$true] %s1244
          %1251 = sst [smem:[#allocation12]] 2048
          %s1252 = scalar_lea.smem [#allocation12], 1
          %1253 = sst [smem:[%s1252]] 4096
          %s1254 = scalar_lea.smem [#allocation12], 2
          %1255 = sst [smem:[%s1254]] 32
          %s1256 = scalar_lea.smem [#allocation12], 3
          %1257 = sst [smem:[%s1256]] 64
          %s1258 = scalar_lea.smem [#allocation12], 4
          %1259 = sst [smem:[%s1258]] 64
          %s1260 = scalar_lea.smem [#allocation12], 5
          %1261 = sst [smem:[%s1260]] 4
          %1263 = dma.general %s1243, 6144, %s1245, %s1217, [#allocation11], [#allocation12], %s1241, 0
        $region60: #{tpu_custom_call.1} parent=39 // pred_fallthru
          _
      $region40: #{tpu_custom_call.1} parent=5 // pred_fallthru
        _
      %p1264 = scmp.le.s32.totalorder 2, %s21
      // Predicated region
      $region61: #{tpu_custom_call.1} parent=5 // pred_check
        %p1265 = pneg %p1264
      $region62: #{tpu_custom_call.1} parent=5 // pred_check_branch
        %1267 = sbr.rel (%p1265) target = $region64
      $region63: #{tpu_custom_call.1} parent=5 // pred_region
        %s1268 = ssub.s32 %s21, 2
        // Predicated region
        $region65: #{tpu_custom_call.1} parent=63 // pred_check
          %p1269 = pneg %p209
        $region66: #{tpu_custom_call.1} parent=63 // pred_check_branch
          %1271 = sbr.rel (%p1269) target = $region68
        $region67: #{tpu_custom_call.1} parent=63 // pred_region
          %s1272 = sand.u32 %s194, 1
          %s1273 = scalar_lea.sflag [#allocation4], %s1272
          %s1274 = sand.u32 %s194, 1
          %s1275 = smul.addr %s1274, 384
          %s1276 = scalar_lea.vmem [#allocation10], %s1275
          %1278 = dma.done %s1273, 6144
        $region68: #{tpu_custom_call.1} parent=63 // pred_fallthru
          _
      $region64: #{tpu_custom_call.1} parent=5 // pred_fallthru
        _
    $region6: #{tpu_custom_call.1} parent=1 // loop_footer
      %s25 = sadd.s32 1, %s21
    $region7: #{tpu_custom_call.1} parent=1 // loop_footer_branch
      %20 = sbr.rel target = $region3
    $region8: #{tpu_custom_call.1} parent=1 // loop_exit
      _
    %1279 = vsyncpa [#allocation3], 1
    %s1280 = scalar_lea.sflag [#allocation3], 1
    %1281 = vsyncpa %s1280, 1
    %1282 = vsyncpa [#allocation6], 1
    %s1283 = scalar_lea.sflag [#allocation6], 1
    %1284 = vsyncpa %s1283, 1
    %1285 = vsyncpa [#allocation9], 1
    %1286 = vsyncpa [#allocation4], 1
    %s1287 = scalar_lea.sflag [#allocation4], 1
    %1288 = vsyncpa %s1287, 1

</llo_original>
